<compile_context>
chip_gen: v5e
topology: v5e:2x2
jax: 0.10.0
libtpu: 0.0.40
codegen_flags: <defaults>
</compile_context>

<pallas_src>
import functools

import jax
import jax.numpy as jnp
from jax.experimental import pallas as pl
from jax.experimental.pallas import tpu as pltpu


def _round_up(x, m):
    return ((x + m - 1) // m) * m


def _num_batch_blocks(batch_size):
    """Use 2 batch blocks on dual-TensorCore chips (v7x / v4 megacore) so the
    'parallel' batch grid axis can be sharded across cores; otherwise 1."""
    if batch_size <= 8:
        return 1
    try:
        kind = jax.devices()[0].device_kind.lower()
    except Exception:
        return 1
    return 2 if ("v7" in kind or "v4" in kind) else 1


def _lstm_chunk_kernel(mask_ref, xproj_ref, whh_ref, out_ref, h_scr, c_scr):
    """One time-chunk of the LSTM recurrence for one batch block.

    mask_ref : (t_chunk, b_blk, 1)       f32   1.0 where t < length[b] else 0.0
    xproj_ref: (t_chunk, b_blk, 4*h_pad) bf16/f32  precomputed x @ W_ih^T + bias
    whh_ref  : (h_pad, 4*h_pad)          bf16/f32  recurrent weights (gate-padded)
    out_ref  : (t_chunk, b_blk, h_pad)   f32
    h_scr/c_scr: (b_blk, h_pad)          f32   recurrent state; persists across
                                               the serial ("arbitrary") chunk axis.
    """
    chunk = pl.program_id(1)
    t_chunk = xproj_ref.shape[0]
    h_pad = h_scr.shape[1]

    @pl.when(chunk == 0)
    def _():
        h_scr[...] = jnp.zeros_like(h_scr)
        c_scr[...] = jnp.zeros_like(c_scr)

    def step(t, carry):
        h_prev, c_prev = carry
        # Recurrent matmul in the (possibly bf16) storage dtype, f32 accumulate.
        # W_hh is read from VMEM inside the step (not hoisted into live vregs)
        # so Mosaic streams it into the MXU.  x_proj is off the h->h chain.
        gates = xproj_ref[t].astype(jnp.float32) + jnp.dot(
            h_prev.astype(whh_ref.dtype), whh_ref[...],
            preferred_element_type=jnp.float32)
        # Gate slabs are 128-lane aligned (h_pad is a multiple of 128).
        i_g = jax.nn.sigmoid(gates[:, 0 * h_pad:1 * h_pad])
        f_g = jax.nn.sigmoid(gates[:, 1 * h_pad:2 * h_pad])
        g_g = jnp.tanh(gates[:, 2 * h_pad:3 * h_pad])
        o_g = jax.nn.sigmoid(gates[:, 3 * h_pad:4 * h_pad])
        c_new = f_g * c_prev + i_g * g_g
        h_new = o_g * jnp.tanh(c_new)
        # Packed-sequence semantics: only the OUTPUT is masked.  The state is
        # deliberately NOT frozen: lengths are a monotone cutoff, so the
        # post-length state never feeds a valid output and stays bounded.
        out_ref[t] = h_new * mask_ref[t]          # off the recurrence critical path
        return (h_new, c_new)

    h_fin, c_fin = jax.lax.fori_loop(0, t_chunk, step,
                                     (h_scr[...], c_scr[...]), unroll=8)
    h_scr[...] = h_fin
    c_scr[...] = c_fin


def _run_lstm_pallas(mask, x_proj, whh_t, *, t_chunk, n_b_blocks):
    t_pad, b_pad, g = x_proj.shape
    h_pad = whh_t.shape[0]
    b_blk = b_pad // n_b_blocks
    n_chunks = t_pad // t_chunk

    return pl.pallas_call(
        _lstm_chunk_kernel,
        out_shape=jax.ShapeDtypeStruct((t_pad, b_pad, h_pad), jnp.float32),
        grid_spec=pltpu.PrefetchScalarGridSpec(
            num_scalar_prefetch=0,
            grid=(n_b_blocks, n_chunks),          # (batch blocks, time chunks)
            in_specs=[
                pl.BlockSpec((t_chunk, b_blk, 1), lambda b, c: (c, b, 0)),   # mask
                pl.BlockSpec((t_chunk, b_blk, g), lambda b, c: (c, b, 0)),   # x_proj
                # Constant-index weight block.  (A further VMEM saving would be
                # pipeline_mode=pl.Buffered(1); omitted for lowering portability.)
                pl.BlockSpec((h_pad, g), lambda b, c: (0, 0)),               # W_hh^T
            ],
            out_specs=pl.BlockSpec((t_chunk, b_blk, h_pad),
                                   lambda b, c: (c, b, 0)),
            scratch_shapes=[
                pltpu.VMEM((b_blk, h_pad), jnp.float32),    # h state
                pltpu.VMEM((b_blk, h_pad), jnp.float32),    # c state
            ],
        ),
        compiler_params=pltpu.CompilerParams(
            # Batch blocks are independent (megacore-shardable on v7x); the
            # time-chunk axis carries the h/c scratch and must stay serial.
            dimension_semantics=("parallel", "arbitrary"),
            # Raise the scoped VMEM limit (16 MiB default on v5e, 32 MiB on
            # v6e/v7x); actual block sizes are capped well below this.
            vmem_limit_bytes=64 * 1024 * 1024,
        ),
    )(mask, x_proj, whh_t)


@functools.partial(jax.jit, static_argnames=("max_len", "compute_dtype"))
def seq2seq_encoder_forward(sequences_batch, sequences_lengths, params,
                            max_len=None, compute_dtype=jnp.bfloat16):
    """Equivalent of Seq2SeqEncoder.forward (LSTM, 1 layer, unidirectional).

    Returns a (B, T, H) float32 array (zeros past each sequence's length).
    Pass a static `max_len` to reproduce pad_packed_sequence's truncation
    without a device->host sync.  `compute_dtype` controls the storage dtype
    of x_proj / W_hh (MXU operands); element-wise math is always f32.
    """
    w_ih, w_hh, b_ih, b_hh = params
    B, T, D = sequences_batch.shape
    H = w_hh.shape[1]

    n_b_blocks = _num_batch_blocks(B)
    b_pad = _round_up(B, 8 * n_b_blocks)      # sublane / MXU-M alignment
    b_blk = b_pad // n_b_blocks
    h_pad = _round_up(H, 128)                 # lane-align every gate slab
    g = 4 * h_pad

    # Time-chunk sizing: amortize the ~0.35us per-grid-step overhead, but keep
    # the double-buffered streamed blocks (x_proj + out + mask) within a budget
    # that leaves headroom inside v7x's 64 MiB VMEM (v5e/v6e have 128 MiB).
    itemsize = jnp.dtype(compute_dtype).itemsize
    stream_bytes_per_t = b_blk * (g * itemsize + h_pad * 4 + 4)
    vmem_budget = 24 * 1024 * 1024
    t_cap = max(8, vmem_budget // (2 * stream_bytes_per_t))
    t_chunk = int(min(64, t_cap, _round_up(T, 8)))
    t_chunk = max(8, (t_chunk // 8) * 8)
    t_pad = _round_up(T, t_chunk)

    x = sequences_batch.astype(jnp.float32)
    lens = sequences_lengths.astype(jnp.int32)

    # Pad batch and time (the mask covers padded rows / steps).
    x = jnp.pad(x, ((0, b_pad - B), (0, t_pad - T), (0, 0)))
    lens_pad = jnp.pad(lens, (0, b_pad - B))
    x_tbd = jnp.transpose(x, (1, 0, 2))                       # (T_pad, B_pad, D)

    # Validity mask, precomputed ONCE (hoists the per-step compare out of the
    # serial recurrence; only one multiply per step remains in-kernel).
    mask = (jnp.arange(t_pad, dtype=jnp.int32)[:, None]
            < lens_pad[None, :]).astype(jnp.float32)[:, :, None]  # (T_pad, B_pad, 1)

    # Per-gate lane padding of fused parameters (PyTorch gate order i, f, g, o).
    def pad_gate_cols(w_t):            # (X, 4H) -> (X, 4*h_pad)
        rows = w_t.shape[0]
        w4 = jnp.pad(w_t.reshape(rows, 4, H), ((0, 0), (0, 0), (0, h_pad - H)))
        return w4.reshape(rows, g)

    wih_t = pad_gate_cols(jnp.transpose(w_ih).astype(jnp.float32))    # (D, 4*h_pad)
    whh_t = pad_gate_cols(jnp.transpose(w_hh).astype(jnp.float32))    # (H, 4*h_pad)
    whh_t = jnp.pad(whh_t, ((0, h_pad - H), (0, 0)))                  # (h_pad, 4*h_pad)
    whh_t = whh_t.astype(compute_dtype)
    bias = pad_gate_cols((b_ih + b_hh).astype(jnp.float32).reshape(1, 4 * H))

    # Hoisted input projection: ONE big MXU-friendly GEMM (no time dependence),
    # computed in f32, stored in `compute_dtype` (bf16 halves the dominant HBM
    # stream feeding the recurrence and its VMEM double-buffers).
    x_proj = x_tbd.reshape(t_pad * b_pad, D) @ wih_t + bias
    x_proj = x_proj.astype(compute_dtype).reshape(t_pad, b_pad, g)

    out_tbh = _run_lstm_pallas(mask, x_proj, whh_t,
                               t_chunk=t_chunk, n_b_blocks=n_b_blocks)

    # (T,B,H)->(B,T,H) reorder + un-pad: one fused XLA transpose/slice pass.
    # (Writing batch-major from the kernel would need a per-step dynamic
    # sublane scatter; kept time-major so in-kernel stores stay lane-dense.)
    out = jnp.transpose(out_tbh, (1, 0, 2))[:B, :T, :H]
    if max_len is not None:                                   # static slice only
        out = out[:, :max_len, :]
    return out


def _reference_lstm(sequences_batch, sequences_lengths, params):
    """Pure-JAX reference (packed-sequence LSTM semantics). Returns (B, T, H)."""
    w_ih, w_hh, b_ih, b_hh = params
    B, T, D = sequences_batch.shape
    H = w_hh.shape[1]
    bias = b_ih + b_hh

    def step(carry, xt_and_t):
        h, c = carry
        x_t, t = xt_and_t
        gates = x_t @ w_ih.T + h @ w_hh.T + bias
        i = jax.nn.sigmoid(gates[:, 0 * H:1 * H])
        f = jax.nn.sigmoid(gates[:, 1 * H:2 * H])
        gg = jnp.tanh(gates[:, 2 * H:3 * H])
        o = jax.nn.sigmoid(gates[:, 3 * H:4 * H])
        c_new = f * c + i * gg
        h_new = o * jnp.tanh(c_new)
        valid = (sequences_lengths > t)[:, None]
        c = jnp.where(valid, c_new, c)
        h = jnp.where(valid, h_new, h)
        out = jnp.where(valid, h_new, 0.0)
        return (h, c), out

    x_tbd = jnp.transpose(sequences_batch, (1, 0, 2))
    (_, _), outs = jax.lax.scan(step, (jnp.zeros((B, H)), jnp.zeros((B, H))),
                                (x_tbd, jnp.arange(T)))
    return jnp.transpose(outs, (1, 0, 2))


if __name__ == "__main__":
    # Small shapes consistent with the module: batch=4, seq=8, input=16, hidden=32.
    B, T, D, H = 4, 8, 16, 32

    key = jax.random.PRNGKey(0)
    k_x, k_wih, k_whh, k_bih, k_bhh = jax.random.split(key, 5)

    # Deterministic PyTorch-LSTM-style init: uniform(-1/sqrt(H), 1/sqrt(H)).
    scale = 1.0 / jnp.sqrt(H)
    w_ih = jax.random.uniform(k_wih, (4 * H, D), jnp.float32, -scale, scale)
    w_hh = jax.random.uniform(k_whh, (4 * H, H), jnp.float32, -scale, scale)
    b_ih = jax.random.uniform(k_bih, (4 * H,), jnp.float32, -scale, scale)
    b_hh = jax.random.uniform(k_bhh, (4 * H,), jnp.float32, -scale, scale)
    params = (w_ih, w_hh, b_ih, b_hh)

    sequences_batch = jax.random.normal(k_x, (B, T, D), jnp.float32)
    sequences_lengths = jnp.array([8, 5, 3, 7], dtype=jnp.int32)

    ref = _reference_lstm(sequences_batch, sequences_lengths, params)

    # Strict f32 mode: proves kernel recurrence + packed-sequence masking exact.
    out_f32 = seq2seq_encoder_forward(sequences_batch, sequences_lengths, params,
                                      max_len=T, compute_dtype=jnp.float32)
    out_f32 = jax.block_until_ready(out_f32)
    assert out_f32.shape == (B, T, H), out_f32.shape
    assert jnp.allclose(out_f32, ref, atol=1e-5, rtol=1e-5), "f32 mismatch vs reference"

    # Optimized default path (bf16 MXU operands, f32 accumulate/elementwise):
    # tolerance re-baselined for bf16 operand rounding.
    out_bf16 = seq2seq_encoder_forward(sequences_batch, sequences_lengths, params,
                                       max_len=T)
    out_bf16 = jax.block_until_ready(out_bf16)
    assert out_bf16.shape == (B, T, H), out_bf16.shape
    assert jnp.allclose(out_bf16, ref, atol=5e-2, rtol=5e-2), "bf16 mismatch vs reference"

    print("KERNEL_OK")
</pallas_src>

<mosaic_0001>
module attributes {stable_mosaic.version = 11 : i64} {
  func.func @_lstm_chunk_kernel(%arg0: i32, %arg1: i32, %arg2: memref<8x8x1xf32, #tpu.memory_space<vmem>>, %arg3: memref<8x8x512xf32, #tpu.memory_space<vmem>>, %arg4: memref<128x512xf32, #tpu.memory_space<vmem>>, %arg5: memref<8x8x128xf32, #tpu.memory_space<vmem>>, %arg6: memref<8x128xf32, #tpu.memory_space<vmem>>, %arg7: memref<8x128xf32, #tpu.memory_space<vmem>>) attributes {dimension_semantics = [#tpu.dimension_semantics<parallel>, #tpu.dimension_semantics<arbitrary>], iteration_bounds = array<i64: 1, 1>, scalar_prefetch = 0 : i64, scratch_operands = 2 : i64, tpu.core_type = #tpu.core_type<tc>, window_params = [{transform_indices = @transform_0, window_bounds = array<i64: 8, 8, 1>}, {transform_indices = @transform_1, window_bounds = array<i64: 8, 8, 512>}, {pipeline_mode = #tpu.pipeline_mode<synchronous>, transform_indices = @transform_2, window_bounds = array<i64: 128, 512>}, {transform_indices = @transform_3, window_bounds = array<i64: 8, 8, 128>}]} {
    %c0_i32 = arith.constant 0 : i32
    %0 = arith.cmpi eq, %arg1, %c0_i32 : i32
    %1 = arith.extui %0 : i1 to i32
    %c0_i32_0 = arith.constant 0 : i32
    %2 = arith.cmpi ne, %1, %c0_i32_0 : i32
    scf.if %2 {
      %cst_104 = arith.constant 0.000000e+00 : f32
      %327 = vector.broadcast %cst_104 : f32 to vector<8x128xf32>
      %c0_105 = arith.constant 0 : index
      %c0_106 = arith.constant 0 : index
      %328 = vector.load %arg6[%c0_105, %c0_106] : memref<8x128xf32, #tpu.memory_space<vmem>>, vector<8x128xf32>
      tpu.vector_store %arg6[%c0_105, %c0_106], %327 {strides = array<i32>} : memref<8x128xf32, #tpu.memory_space<vmem>>, vector<8x128xf32>,
      %cst_107 = arith.constant 0.000000e+00 : f32
      %329 = vector.broadcast %cst_107 : f32 to vector<8x128xf32>
      %c0_108 = arith.constant 0 : index
      %c0_109 = arith.constant 0 : index
      %330 = vector.load %arg7[%c0_108, %c0_109] : memref<8x128xf32, #tpu.memory_space<vmem>>, vector<8x128xf32>
      tpu.vector_store %arg7[%c0_108, %c0_109], %329 {strides = array<i32>} : memref<8x128xf32, #tpu.memory_space<vmem>>, vector<8x128xf32>,
    } else {
    }
    %c0 = arith.constant 0 : index
    %c0_1 = arith.constant 0 : index
    %3 = vector.load %arg6[%c0, %c0_1] : memref<8x128xf32, #tpu.memory_space<vmem>>, vector<8x128xf32>
    %c0_2 = arith.constant 0 : index
    %c0_3 = arith.constant 0 : index
    %4 = vector.load %arg7[%c0_2, %c0_3] : memref<8x128xf32, #tpu.memory_space<vmem>>, vector<8x128xf32>
    %c0_i32_4 = arith.constant 0 : i32
    %5 = arith.index_cast %c0_i32_4 : i32 to index
    %c0_5 = arith.constant 0 : index
    %c0_6 = arith.constant 0 : index
    %6 = vector.load %arg3[%5, %c0_5, %c0_6] : memref<8x8x512xf32, #tpu.memory_space<vmem>>, vector<1x8x512xf32>
    %7 = vector.shape_cast %6 : vector<1x8x512xf32> to vector<8x512xf32>
    %c0_7 = arith.constant 0 : index
    %c0_8 = arith.constant 0 : index
    %8 = vector.load %arg4[%c0_7, %c0_8] : memref<128x512xf32, #tpu.memory_space<vmem>>, vector<128x512xf32>
    %cst = arith.constant dense<0.000000e+00> : vector<8x512xf32>
    %9 = tpu.matmul %3, %8, %cst {dimension_numbers = #tpu.dot_dimension_numbers<[1], [0], [0], [1], [0, 0, 1, 1], [], []>} : vector<8x128xf32>, vector<128x512xf32>, vector<8x512xf32> -> vector<8x512xf32>
    %10 = arith.addf %7, %9 : vector<8x512xf32>
    %11 = vector.extract_strided_slice %10 {offsets = [0, 0], sizes = [8, 128], strides = [1, 1]} : vector<8x512xf32> to vector<8x128xf32>
    %12 = arith.negf %11 : vector<8x128xf32>
    %13 = math.exp %12 : vector<8x128xf32>
    %cst_9 = arith.constant 1.000000e+00 : f32
    %14 = vector.broadcast %cst_9 : f32 to vector<8x128xf32>
    %15 = arith.addf %14, %13 : vector<8x128xf32>
    %16 = arith.divf %14, %15 : vector<8x128xf32>
    %17 = vector.extract_strided_slice %10 {offsets = [0, 128], sizes = [8, 128], strides = [1, 1]} : vector<8x512xf32> to vector<8x128xf32>
    %18 = arith.negf %17 : vector<8x128xf32>
    %19 = math.exp %18 : vector<8x128xf32>
    %cst_10 = arith.constant 1.000000e+00 : f32
    %20 = vector.broadcast %cst_10 : f32 to vector<8x128xf32>
    %21 = arith.addf %20, %19 : vector<8x128xf32>
    %22 = arith.divf %20, %21 : vector<8x128xf32>
    %23 = vector.extract_strided_slice %10 {offsets = [0, 256], sizes = [8, 128], strides = [1, 1]} : vector<8x512xf32> to vector<8x128xf32>
    %24 = math.tanh %23 : vector<8x128xf32>
    %25 = vector.extract_strided_slice %10 {offsets = [0, 384], sizes = [8, 128], strides = [1, 1]} : vector<8x512xf32> to vector<8x128xf32>
    %26 = arith.negf %25 : vector<8x128xf32>
    %27 = math.exp %26 : vector<8x128xf32>
    %cst_11 = arith.constant 1.000000e+00 : f32
    %28 = vector.broadcast %cst_11 : f32 to vector<8x128xf32>
    %29 = arith.addf %28, %27 : vector<8x128xf32>
    %30 = arith.divf %28, %29 : vector<8x128xf32>
    %31 = arith.mulf %22, %4 : vector<8x128xf32>
    %32 = arith.mulf %16, %24 : vector<8x128xf32>
    %33 = arith.addf %31, %32 : vector<8x128xf32>
    %34 = math.tanh %33 : vector<8x128xf32>
    %35 = arith.mulf %30, %34 : vector<8x128xf32>
    %36 = arith.index_cast %c0_i32_4 : i32 to index
    %c0_12 = arith.constant 0 : index
    %c0_13 = arith.constant 0 : index
    %37 = vector.load %arg2[%36, %c0_12, %c0_13] : memref<8x8x1xf32, #tpu.memory_space<vmem>>, vector<1x8x1xf32>
    %38 = vector.shape_cast %37 : vector<1x8x1xf32> to vector<8x1xf32>
    %39 = vector.broadcast %38 : vector<8x1xf32> to vector<8x128xf32>
    %40 = arith.mulf %35, %39 : vector<8x128xf32>
    %41 = arith.index_cast %c0_i32_4 : i32 to index
    %c0_14 = arith.constant 0 : index
    %c0_15 = arith.constant 0 : index
    %42 = vector.load %arg5[%41, %c0_14, %c0_15] : memref<8x8x128xf32, #tpu.memory_space<vmem>>, vector<1x8x128xf32>
    %43 = vector.shape_cast %42 : vector<1x8x128xf32> to vector<8x128xf32>
    %44 = vector.shape_cast %40 : vector<8x128xf32> to vector<1x8x128xf32>
    tpu.vector_store %arg5[%41, %c0_14, %c0_15], %44 {strides = array<i32>} : memref<8x8x128xf32, #tpu.memory_space<vmem>>, vector<1x8x128xf32>,
    %c1_i32 = arith.constant 1 : i32
    %45 = arith.index_cast %c1_i32 : i32 to index
    %c0_16 = arith.constant 0 : index
    %c0_17 = arith.constant 0 : index
    %46 = vector.load %arg3[%45, %c0_16, %c0_17] : memref<8x8x512xf32, #tpu.memory_space<vmem>>, vector<1x8x512xf32>
    %47 = vector.shape_cast %46 : vector<1x8x512xf32> to vector<8x512xf32>
    %c0_18 = arith.constant 0 : index
    %c0_19 = arith.constant 0 : index
    %48 = vector.load %arg4[%c0_18, %c0_19] : memref<128x512xf32, #tpu.memory_space<vmem>>, vector<128x512xf32>
    %cst_20 = arith.constant dense<0.000000e+00> : vector<8x512xf32>
    %49 = tpu.matmul %35, %48, %cst_20 {dimension_numbers = #tpu.dot_dimension_numbers<[1], [0], [0], [1], [0, 0, 1, 1], [], []>} : vector<8x128xf32>, vector<128x512xf32>, vector<8x512xf32> -> vector<8x512xf32>
    %50 = arith.addf %47, %49 : vector<8x512xf32>
    %51 = vector.extract_strided_slice %50 {offsets = [0, 0], sizes = [8, 128], strides = [1, 1]} : vector<8x512xf32> to vector<8x128xf32>
    %52 = arith.negf %51 : vector<8x128xf32>
    %53 = math.exp %52 : vector<8x128xf32>
    %cst_21 = arith.constant 1.000000e+00 : f32
    %54 = vector.broadcast %cst_21 : f32 to vector<8x128xf32>
    %55 = arith.addf %54, %53 : vector<8x128xf32>
    %56 = arith.divf %54, %55 : vector<8x128xf32>
    %57 = vector.extract_strided_slice %50 {offsets = [0, 128], sizes = [8, 128], strides = [1, 1]} : vector<8x512xf32> to vector<8x128xf32>
    %58 = arith.negf %57 : vector<8x128xf32>
    %59 = math.exp %58 : vector<8x128xf32>
    %cst_22 = arith.constant 1.000000e+00 : f32
    %60 = vector.broadcast %cst_22 : f32 to vector<8x128xf32>
    %61 = arith.addf %60, %59 : vector<8x128xf32>
    %62 = arith.divf %60, %61 : vector<8x128xf32>
    %63 = vector.extract_strided_slice %50 {offsets = [0, 256], sizes = [8, 128], strides = [1, 1]} : vector<8x512xf32> to vector<8x128xf32>
    %64 = math.tanh %63 : vector<8x128xf32>
    %65 = vector.extract_strided_slice %50 {offsets = [0, 384], sizes = [8, 128], strides = [1, 1]} : vector<8x512xf32> to vector<8x128xf32>
    %66 = arith.negf %65 : vector<8x128xf32>
    %67 = math.exp %66 : vector<8x128xf32>
    %cst_23 = arith.constant 1.000000e+00 : f32
    %68 = vector.broadcast %cst_23 : f32 to vector<8x128xf32>
    %69 = arith.addf %68, %67 : vector<8x128xf32>
    %70 = arith.divf %68, %69 : vector<8x128xf32>
    %71 = arith.mulf %62, %33 : vector<8x128xf32>
    %72 = arith.mulf %56, %64 : vector<8x128xf32>
    %73 = arith.addf %71, %72 : vector<8x128xf32>
    %74 = math.tanh %73 : vector<8x128xf32>
    %75 = arith.mulf %70, %74 : vector<8x128xf32>
    %76 = arith.index_cast %c1_i32 : i32 to index
    %c0_24 = arith.constant 0 : index
    %c0_25 = arith.constant 0 : index
    %77 = vector.load %arg2[%76, %c0_24, %c0_25] : memref<8x8x1xf32, #tpu.memory_space<vmem>>, vector<1x8x1xf32>
    %78 = vector.shape_cast %77 : vector<1x8x1xf32> to vector<8x1xf32>
    %79 = vector.broadcast %78 : vector<8x1xf32> to vector<8x128xf32>
    %80 = arith.mulf %75, %79 : vector<8x128xf32>
    %81 = arith.index_cast %c1_i32 : i32 to index
    %c0_26 = arith.constant 0 : index
    %c0_27 = arith.constant 0 : index
    %82 = vector.load %arg5[%81, %c0_26, %c0_27] : memref<8x8x128xf32, #tpu.memory_space<vmem>>, vector<1x8x128xf32>
    %83 = vector.shape_cast %82 : vector<1x8x128xf32> to vector<8x128xf32>
    %84 = vector.shape_cast %80 : vector<8x128xf32> to vector<1x8x128xf32>
    tpu.vector_store %arg5[%81, %c0_26, %c0_27], %84 {strides = array<i32>} : memref<8x8x128xf32, #tpu.memory_space<vmem>>, vector<1x8x128xf32>,
    %c2_i32 = arith.constant 2 : i32
    %85 = arith.index_cast %c2_i32 : i32 to index
    %c0_28 = arith.constant 0 : index
    %c0_29 = arith.constant 0 : index
    %86 = vector.load %arg3[%85, %c0_28, %c0_29] : memref<8x8x512xf32, #tpu.memory_space<vmem>>, vector<1x8x512xf32>
    %87 = vector.shape_cast %86 : vector<1x8x512xf32> to vector<8x512xf32>
    %c0_30 = arith.constant 0 : index
    %c0_31 = arith.constant 0 : index
    %88 = vector.load %arg4[%c0_30, %c0_31] : memref<128x512xf32, #tpu.memory_space<vmem>>, vector<128x512xf32>
    %cst_32 = arith.constant dense<0.000000e+00> : vector<8x512xf32>
    %89 = tpu.matmul %75, %88, %cst_32 {dimension_numbers = #tpu.dot_dimension_numbers<[1], [0], [0], [1], [0, 0, 1, 1], [], []>} : vector<8x128xf32>, vector<128x512xf32>, vector<8x512xf32> -> vector<8x512xf32>
    %90 = arith.addf %87, %89 : vector<8x512xf32>
    %91 = vector.extract_strided_slice %90 {offsets = [0, 0], sizes = [8, 128], strides = [1, 1]} : vector<8x512xf32> to vector<8x128xf32>
    %92 = arith.negf %91 : vector<8x128xf32>
    %93 = math.exp %92 : vector<8x128xf32>
    %cst_33 = arith.constant 1.000000e+00 : f32
    %94 = vector.broadcast %cst_33 : f32 to vector<8x128xf32>
    %95 = arith.addf %94, %93 : vector<8x128xf32>
    %96 = arith.divf %94, %95 : vector<8x128xf32>
    %97 = vector.extract_strided_slice %90 {offsets = [0, 128], sizes = [8, 128], strides = [1, 1]} : vector<8x512xf32> to vector<8x128xf32>
    %98 = arith.negf %97 : vector<8x128xf32>
    %99 = math.exp %98 : vector<8x128xf32>
    %cst_34 = arith.constant 1.000000e+00 : f32
    %100 = vector.broadcast %cst_34 : f32 to vector<8x128xf32>
    %101 = arith.addf %100, %99 : vector<8x128xf32>
    %102 = arith.divf %100, %101 : vector<8x128xf32>
    %103 = vector.extract_strided_slice %90 {offsets = [0, 256], sizes = [8, 128], strides = [1, 1]} : vector<8x512xf32> to vector<8x128xf32>
    %104 = math.tanh %103 : vector<8x128xf32>
    %105 = vector.extract_strided_slice %90 {offsets = [0, 384], sizes = [8, 128], strides = [1, 1]} : vector<8x512xf32> to vector<8x128xf32>
    %106 = arith.negf %105 : vector<8x128xf32>
    %107 = math.exp %106 : vector<8x128xf32>
    %cst_35 = arith.constant 1.000000e+00 : f32
    %108 = vector.broadcast %cst_35 : f32 to vector<8x128xf32>
    %109 = arith.addf %108, %107 : vector<8x128xf32>
    %110 = arith.divf %108, %109 : vector<8x128xf32>
    %111 = arith.mulf %102, %73 : vector<8x128xf32>
    %112 = arith.mulf %96, %104 : vector<8x128xf32>
    %113 = arith.addf %111, %112 : vector<8x128xf32>
    %114 = math.tanh %113 : vector<8x128xf32>
    %115 = arith.mulf %110, %114 : vector<8x128xf32>
    %116 = arith.index_cast %c2_i32 : i32 to index
    %c0_36 = arith.constant 0 : index
    %c0_37 = arith.constant 0 : index
    %117 = vector.load %arg2[%116, %c0_36, %c0_37] : memref<8x8x1xf32, #tpu.memory_space<vmem>>, vector<1x8x1xf32>
    %118 = vector.shape_cast %117 : vector<1x8x1xf32> to vector<8x1xf32>
    %119 = vector.broadcast %118 : vector<8x1xf32> to vector<8x128xf32>
    %120 = arith.mulf %115, %119 : vector<8x128xf32>
    %121 = arith.index_cast %c2_i32 : i32 to index
    %c0_38 = arith.constant 0 : index
    %c0_39 = arith.constant 0 : index
    %122 = vector.load %arg5[%121, %c0_38, %c0_39] : memref<8x8x128xf32, #tpu.memory_space<vmem>>, vector<1x8x128xf32>
    %123 = vector.shape_cast %122 : vector<1x8x128xf32> to vector<8x128xf32>
    %124 = vector.shape_cast %120 : vector<8x128xf32> to vector<1x8x128xf32>
    tpu.vector_store %arg5[%121, %c0_38, %c0_39], %124 {strides = array<i32>} : memref<8x8x128xf32, #tpu.memory_space<vmem>>, vector<1x8x128xf32>,
    %c3_i32 = arith.constant 3 : i32
    %125 = arith.index_cast %c3_i32 : i32 to index
    %c0_40 = arith.constant 0 : index
    %c0_41 = arith.constant 0 : index
    %126 = vector.load %arg3[%125, %c0_40, %c0_41] : memref<8x8x512xf32, #tpu.memory_space<vmem>>, vector<1x8x512xf32>
    %127 = vector.shape_cast %126 : vector<1x8x512xf32> to vector<8x512xf32>
    %c0_42 = arith.constant 0 : index
    %c0_43 = arith.constant 0 : index
    %128 = vector.load %arg4[%c0_42, %c0_43] : memref<128x512xf32, #tpu.memory_space<vmem>>, vector<128x512xf32>
    %cst_44 = arith.constant dense<0.000000e+00> : vector<8x512xf32>
    %129 = tpu.matmul %115, %128, %cst_44 {dimension_numbers = #tpu.dot_dimension_numbers<[1], [0], [0], [1], [0, 0, 1, 1], [], []>} : vector<8x128xf32>, vector<128x512xf32>, vector<8x512xf32> -> vector<8x512xf32>
    %130 = arith.addf %127, %129 : vector<8x512xf32>
    %131 = vector.extract_strided_slice %130 {offsets = [0, 0], sizes = [8, 128], strides = [1, 1]} : vector<8x512xf32> to vector<8x128xf32>
    %132 = arith.negf %131 : vector<8x128xf32>
    %133 = math.exp %132 : vector<8x128xf32>
    %cst_45 = arith.constant 1.000000e+00 : f32
    %134 = vector.broadcast %cst_45 : f32 to vector<8x128xf32>
    %135 = arith.addf %134, %133 : vector<8x128xf32>
    %136 = arith.divf %134, %135 : vector<8x128xf32>
    %137 = vector.extract_strided_slice %130 {offsets = [0, 128], sizes = [8, 128], strides = [1, 1]} : vector<8x512xf32> to vector<8x128xf32>
    %138 = arith.negf %137 : vector<8x128xf32>
    %139 = math.exp %138 : vector<8x128xf32>
    %cst_46 = arith.constant 1.000000e+00 : f32
    %140 = vector.broadcast %cst_46 : f32 to vector<8x128xf32>
    %141 = arith.addf %140, %139 : vector<8x128xf32>
    %142 = arith.divf %140, %141 : vector<8x128xf32>
    %143 = vector.extract_strided_slice %130 {offsets = [0, 256], sizes = [8, 128], strides = [1, 1]} : vector<8x512xf32> to vector<8x128xf32>
    %144 = math.tanh %143 : vector<8x128xf32>
    %145 = vector.extract_strided_slice %130 {offsets = [0, 384], sizes = [8, 128], strides = [1, 1]} : vector<8x512xf32> to vector<8x128xf32>
    %146 = arith.negf %145 : vector<8x128xf32>
    %147 = math.exp %146 : vector<8x128xf32>
    %cst_47 = arith.constant 1.000000e+00 : f32
    %148 = vector.broadcast %cst_47 : f32 to vector<8x128xf32>
    %149 = arith.addf %148, %147 : vector<8x128xf32>
    %150 = arith.divf %148, %149 : vector<8x128xf32>
    %151 = arith.mulf %142, %113 : vector<8x128xf32>
    %152 = arith.mulf %136, %144 : vector<8x128xf32>
    %153 = arith.addf %151, %152 : vector<8x128xf32>
    %154 = math.tanh %153 : vector<8x128xf32>
    %155 = arith.mulf %150, %154 : vector<8x128xf32>
    %156 = arith.index_cast %c3_i32 : i32 to index
    %c0_48 = arith.constant 0 : index
    %c0_49 = arith.constant 0 : index
    %157 = vector.load %arg2[%156, %c0_48, %c0_49] : memref<8x8x1xf32, #tpu.memory_space<vmem>>, vector<1x8x1xf32>
    %158 = vector.shape_cast %157 : vector<1x8x1xf32> to vector<8x1xf32>
    %159 = vector.broadcast %158 : vector<8x1xf32> to vector<8x128xf32>
    %160 = arith.mulf %155, %159 : vector<8x128xf32>
    %161 = arith.index_cast %c3_i32 : i32 to index
    %c0_50 = arith.constant 0 : index
    %c0_51 = arith.constant 0 : index
    %162 = vector.load %arg5[%161, %c0_50, %c0_51] : memref<8x8x128xf32, #tpu.memory_space<vmem>>, vector<1x8x128xf32>
    %163 = vector.shape_cast %162 : vector<1x8x128xf32> to vector<8x128xf32>
    %164 = vector.shape_cast %160 : vector<8x128xf32> to vector<1x8x128xf32>
    tpu.vector_store %arg5[%161, %c0_50, %c0_51], %164 {strides = array<i32>} : memref<8x8x128xf32, #tpu.memory_space<vmem>>, vector<1x8x128xf32>,
    %c4_i32 = arith.constant 4 : i32
    %165 = arith.index_cast %c4_i32 : i32 to index
    %c0_52 = arith.constant 0 : index
    %c0_53 = arith.constant 0 : index
    %166 = vector.load %arg3[%165, %c0_52, %c0_53] : memref<8x8x512xf32, #tpu.memory_space<vmem>>, vector<1x8x512xf32>
    %167 = vector.shape_cast %166 : vector<1x8x512xf32> to vector<8x512xf32>
    %c0_54 = arith.constant 0 : index
    %c0_55 = arith.constant 0 : index
    %168 = vector.load %arg4[%c0_54, %c0_55] : memref<128x512xf32, #tpu.memory_space<vmem>>, vector<128x512xf32>
    %cst_56 = arith.constant dense<0.000000e+00> : vector<8x512xf32>
    %169 = tpu.matmul %155, %168, %cst_56 {dimension_numbers = #tpu.dot_dimension_numbers<[1], [0], [0], [1], [0, 0, 1, 1], [], []>} : vector<8x128xf32>, vector<128x512xf32>, vector<8x512xf32> -> vector<8x512xf32>
    %170 = arith.addf %167, %169 : vector<8x512xf32>
    %171 = vector.extract_strided_slice %170 {offsets = [0, 0], sizes = [8, 128], strides = [1, 1]} : vector<8x512xf32> to vector<8x128xf32>
    %172 = arith.negf %171 : vector<8x128xf32>
    %173 = math.exp %172 : vector<8x128xf32>
    %cst_57 = arith.constant 1.000000e+00 : f32
    %174 = vector.broadcast %cst_57 : f32 to vector<8x128xf32>
    %175 = arith.addf %174, %173 : vector<8x128xf32>
    %176 = arith.divf %174, %175 : vector<8x128xf32>
    %177 = vector.extract_strided_slice %170 {offsets = [0, 128], sizes = [8, 128], strides = [1, 1]} : vector<8x512xf32> to vector<8x128xf32>
    %178 = arith.negf %177 : vector<8x128xf32>
    %179 = math.exp %178 : vector<8x128xf32>
    %cst_58 = arith.constant 1.000000e+00 : f32
    %180 = vector.broadcast %cst_58 : f32 to vector<8x128xf32>
    %181 = arith.addf %180, %179 : vector<8x128xf32>
    %182 = arith.divf %180, %181 : vector<8x128xf32>
    %183 = vector.extract_strided_slice %170 {offsets = [0, 256], sizes = [8, 128], strides = [1, 1]} : vector<8x512xf32> to vector<8x128xf32>
    %184 = math.tanh %183 : vector<8x128xf32>
    %185 = vector.extract_strided_slice %170 {offsets = [0, 384], sizes = [8, 128], strides = [1, 1]} : vector<8x512xf32> to vector<8x128xf32>
    %186 = arith.negf %185 : vector<8x128xf32>
    %187 = math.exp %186 : vector<8x128xf32>
    %cst_59 = arith.constant 1.000000e+00 : f32
    %188 = vector.broadcast %cst_59 : f32 to vector<8x128xf32>
    %189 = arith.addf %188, %187 : vector<8x128xf32>
    %190 = arith.divf %188, %189 : vector<8x128xf32>
    %191 = arith.mulf %182, %153 : vector<8x128xf32>
    %192 = arith.mulf %176, %184 : vector<8x128xf32>
    %193 = arith.addf %191, %192 : vector<8x128xf32>
    %194 = math.tanh %193 : vector<8x128xf32>
    %195 = arith.mulf %190, %194 : vector<8x128xf32>
    %196 = arith.index_cast %c4_i32 : i32 to index
    %c0_60 = arith.constant 0 : index
    %c0_61 = arith.constant 0 : index
    %197 = vector.load %arg2[%196, %c0_60, %c0_61] : memref<8x8x1xf32, #tpu.memory_space<vmem>>, vector<1x8x1xf32>
    %198 = vector.shape_cast %197 : vector<1x8x1xf32> to vector<8x1xf32>
    %199 = vector.broadcast %198 : vector<8x1xf32> to vector<8x128xf32>
    %200 = arith.mulf %195, %199 : vector<8x128xf32>
    %201 = arith.index_cast %c4_i32 : i32 to index
    %c0_62 = arith.constant 0 : index
    %c0_63 = arith.constant 0 : index
    %202 = vector.load %arg5[%201, %c0_62, %c0_63] : memref<8x8x128xf32, #tpu.memory_space<vmem>>, vector<1x8x128xf32>
    %203 = vector.shape_cast %202 : vector<1x8x128xf32> to vector<8x128xf32>
    %204 = vector.shape_cast %200 : vector<8x128xf32> to vector<1x8x128xf32>
    tpu.vector_store %arg5[%201, %c0_62, %c0_63], %204 {strides = array<i32>} : memref<8x8x128xf32, #tpu.memory_space<vmem>>, vector<1x8x128xf32>,
    %c5_i32 = arith.constant 5 : i32
    %205 = arith.index_cast %c5_i32 : i32 to index
    %c0_64 = arith.constant 0 : index
    %c0_65 = arith.constant 0 : index
    %206 = vector.load %arg3[%205, %c0_64, %c0_65] : memref<8x8x512xf32, #tpu.memory_space<vmem>>, vector<1x8x512xf32>
    %207 = vector.shape_cast %206 : vector<1x8x512xf32> to vector<8x512xf32>
    %c0_66 = arith.constant 0 : index
    %c0_67 = arith.constant 0 : index
    %208 = vector.load %arg4[%c0_66, %c0_67] : memref<128x512xf32, #tpu.memory_space<vmem>>, vector<128x512xf32>
    %cst_68 = arith.constant dense<0.000000e+00> : vector<8x512xf32>
    %209 = tpu.matmul %195, %208, %cst_68 {dimension_numbers = #tpu.dot_dimension_numbers<[1], [0], [0], [1], [0, 0, 1, 1], [], []>} : vector<8x128xf32>, vector<128x512xf32>, vector<8x512xf32> -> vector<8x512xf32>
    %210 = arith.addf %207, %209 : vector<8x512xf32>
    %211 = vector.extract_strided_slice %210 {offsets = [0, 0], sizes = [8, 128], strides = [1, 1]} : vector<8x512xf32> to vector<8x128xf32>
    %212 = arith.negf %211 : vector<8x128xf32>
    %213 = math.exp %212 : vector<8x128xf32>
    %cst_69 = arith.constant 1.000000e+00 : f32
    %214 = vector.broadcast %cst_69 : f32 to vector<8x128xf32>
    %215 = arith.addf %214, %213 : vector<8x128xf32>
    %216 = arith.divf %214, %215 : vector<8x128xf32>
    %217 = vector.extract_strided_slice %210 {offsets = [0, 128], sizes = [8, 128], strides = [1, 1]} : vector<8x512xf32> to vector<8x128xf32>
    %218 = arith.negf %217 : vector<8x128xf32>
    %219 = math.exp %218 : vector<8x128xf32>
    %cst_70 = arith.constant 1.000000e+00 : f32
    %220 = vector.broadcast %cst_70 : f32 to vector<8x128xf32>
    %221 = arith.addf %220, %219 : vector<8x128xf32>
    %222 = arith.divf %220, %221 : vector<8x128xf32>
    %223 = vector.extract_strided_slice %210 {offsets = [0, 256], sizes = [8, 128], strides = [1, 1]} : vector<8x512xf32> to vector<8x128xf32>
    %224 = math.tanh %223 : vector<8x128xf32>
    %225 = vector.extract_strided_slice %210 {offsets = [0, 384], sizes = [8, 128], strides = [1, 1]} : vector<8x512xf32> to vector<8x128xf32>
    %226 = arith.negf %225 : vector<8x128xf32>
    %227 = math.exp %226 : vector<8x128xf32>
    %cst_71 = arith.constant 1.000000e+00 : f32
    %228 = vector.broadcast %cst_71 : f32 to vector<8x128xf32>
    %229 = arith.addf %228, %227 : vector<8x128xf32>
    %230 = arith.divf %228, %229 : vector<8x128xf32>
    %231 = arith.mulf %222, %193 : vector<8x128xf32>
    %232 = arith.mulf %216, %224 : vector<8x128xf32>
    %233 = arith.addf %231, %232 : vector<8x128xf32>
    %234 = math.tanh %233 : vector<8x128xf32>
    %235 = arith.mulf %230, %234 : vector<8x128xf32>
    %236 = arith.index_cast %c5_i32 : i32 to index
    %c0_72 = arith.constant 0 : index
    %c0_73 = arith.constant 0 : index
    %237 = vector.load %arg2[%236, %c0_72, %c0_73] : memref<8x8x1xf32, #tpu.memory_space<vmem>>, vector<1x8x1xf32>
    %238 = vector.shape_cast %237 : vector<1x8x1xf32> to vector<8x1xf32>
    %239 = vector.broadcast %238 : vector<8x1xf32> to vector<8x128xf32>
    %240 = arith.mulf %235, %239 : vector<8x128xf32>
    %241 = arith.index_cast %c5_i32 : i32 to index
    %c0_74 = arith.constant 0 : index
    %c0_75 = arith.constant 0 : index
    %242 = vector.load %arg5[%241, %c0_74, %c0_75] : memref<8x8x128xf32, #tpu.memory_space<vmem>>, vector<1x8x128xf32>
    %243 = vector.shape_cast %242 : vector<1x8x128xf32> to vector<8x128xf32>
    %244 = vector.shape_cast %240 : vector<8x128xf32> to vector<1x8x128xf32>
    tpu.vector_store %arg5[%241, %c0_74, %c0_75], %244 {strides = array<i32>} : memref<8x8x128xf32, #tpu.memory_space<vmem>>, vector<1x8x128xf32>,
    %c6_i32 = arith.constant 6 : i32
    %245 = arith.index_cast %c6_i32 : i32 to index
    %c0_76 = arith.constant 0 : index
    %c0_77 = arith.constant 0 : index
    %246 = vector.load %arg3[%245, %c0_76, %c0_77] : memref<8x8x512xf32, #tpu.memory_space<vmem>>, vector<1x8x512xf32>
    %247 = vector.shape_cast %246 : vector<1x8x512xf32> to vector<8x512xf32>
    %c0_78 = arith.constant 0 : index
    %c0_79 = arith.constant 0 : index
    %248 = vector.load %arg4[%c0_78, %c0_79] : memref<128x512xf32, #tpu.memory_space<vmem>>, vector<128x512xf32>
    %cst_80 = arith.constant dense<0.000000e+00> : vector<8x512xf32>
    %249 = tpu.matmul %235, %248, %cst_80 {dimension_numbers = #tpu.dot_dimension_numbers<[1], [0], [0], [1], [0, 0, 1, 1], [], []>} : vector<8x128xf32>, vector<128x512xf32>, vector<8x512xf32> -> vector<8x512xf32>
    %250 = arith.addf %247, %249 : vector<8x512xf32>
    %251 = vector.extract_strided_slice %250 {offsets = [0, 0], sizes = [8, 128], strides = [1, 1]} : vector<8x512xf32> to vector<8x128xf32>
    %252 = arith.negf %251 : vector<8x128xf32>
    %253 = math.exp %252 : vector<8x128xf32>
    %cst_81 = arith.constant 1.000000e+00 : f32
    %254 = vector.broadcast %cst_81 : f32 to vector<8x128xf32>
    %255 = arith.addf %254, %253 : vector<8x128xf32>
    %256 = arith.divf %254, %255 : vector<8x128xf32>
    %257 = vector.extract_strided_slice %250 {offsets = [0, 128], sizes = [8, 128], strides = [1, 1]} : vector<8x512xf32> to vector<8x128xf32>
    %258 = arith.negf %257 : vector<8x128xf32>
    %259 = math.exp %258 : vector<8x128xf32>
    %cst_82 = arith.constant 1.000000e+00 : f32
    %260 = vector.broadcast %cst_82 : f32 to vector<8x128xf32>
    %261 = arith.addf %260, %259 : vector<8x128xf32>
    %262 = arith.divf %260, %261 : vector<8x128xf32>
    %263 = vector.extract_strided_slice %250 {offsets = [0, 256], sizes = [8, 128], strides = [1, 1]} : vector<8x512xf32> to vector<8x128xf32>
    %264 = math.tanh %263 : vector<8x128xf32>
    %265 = vector.extract_strided_slice %250 {offsets = [0, 384], sizes = [8, 128], strides = [1, 1]} : vector<8x512xf32> to vector<8x128xf32>
    %266 = arith.negf %265 : vector<8x128xf32>
    %267 = math.exp %266 : vector<8x128xf32>
    %cst_83 = arith.constant 1.000000e+00 : f32
    %268 = vector.broadcast %cst_83 : f32 to vector<8x128xf32>
    %269 = arith.addf %268, %267 : vector<8x128xf32>
    %270 = arith.divf %268, %269 : vector<8x128xf32>
    %271 = arith.mulf %262, %233 : vector<8x128xf32>
    %272 = arith.mulf %256, %264 : vector<8x128xf32>
    %273 = arith.addf %271, %272 : vector<8x128xf32>
    %274 = math.tanh %273 : vector<8x128xf32>
    %275 = arith.mulf %270, %274 : vector<8x128xf32>
    %276 = arith.index_cast %c6_i32 : i32 to index
    %c0_84 = arith.constant 0 : index
    %c0_85 = arith.constant 0 : index
    %277 = vector.load %arg2[%276, %c0_84, %c0_85] : memref<8x8x1xf32, #tpu.memory_space<vmem>>, vector<1x8x1xf32>
    %278 = vector.shape_cast %277 : vector<1x8x1xf32> to vector<8x1xf32>
    %279 = vector.broadcast %278 : vector<8x1xf32> to vector<8x128xf32>
    %280 = arith.mulf %275, %279 : vector<8x128xf32>
    %281 = arith.index_cast %c6_i32 : i32 to index
    %c0_86 = arith.constant 0 : index
    %c0_87 = arith.constant 0 : index
    %282 = vector.load %arg5[%281, %c0_86, %c0_87] : memref<8x8x128xf32, #tpu.memory_space<vmem>>, vector<1x8x128xf32>
    %283 = vector.shape_cast %282 : vector<1x8x128xf32> to vector<8x128xf32>
    %284 = vector.shape_cast %280 : vector<8x128xf32> to vector<1x8x128xf32>
    tpu.vector_store %arg5[%281, %c0_86, %c0_87], %284 {strides = array<i32>} : memref<8x8x128xf32, #tpu.memory_space<vmem>>, vector<1x8x128xf32>,
    %c7_i32 = arith.constant 7 : i32
    %285 = arith.index_cast %c7_i32 : i32 to index
    %c0_88 = arith.constant 0 : index
    %c0_89 = arith.constant 0 : index
    %286 = vector.load %arg3[%285, %c0_88, %c0_89] : memref<8x8x512xf32, #tpu.memory_space<vmem>>, vector<1x8x512xf32>
    %287 = vector.shape_cast %286 : vector<1x8x512xf32> to vector<8x512xf32>
    %c0_90 = arith.constant 0 : index
    %c0_91 = arith.constant 0 : index
    %288 = vector.load %arg4[%c0_90, %c0_91] : memref<128x512xf32, #tpu.memory_space<vmem>>, vector<128x512xf32>
    %cst_92 = arith.constant dense<0.000000e+00> : vector<8x512xf32>
    %289 = tpu.matmul %275, %288, %cst_92 {dimension_numbers = #tpu.dot_dimension_numbers<[1], [0], [0], [1], [0, 0, 1, 1], [], []>} : vector<8x128xf32>, vector<128x512xf32>, vector<8x512xf32> -> vector<8x512xf32>
    %290 = arith.addf %287, %289 : vector<8x512xf32>
    %291 = vector.extract_strided_slice %290 {offsets = [0, 0], sizes = [8, 128], strides = [1, 1]} : vector<8x512xf32> to vector<8x128xf32>
    %292 = arith.negf %291 : vector<8x128xf32>
    %293 = math.exp %292 : vector<8x128xf32>
    %cst_93 = arith.constant 1.000000e+00 : f32
    %294 = vector.broadcast %cst_93 : f32 to vector<8x128xf32>
    %295 = arith.addf %294, %293 : vector<8x128xf32>
    %296 = arith.divf %294, %295 : vector<8x128xf32>
    %297 = vector.extract_strided_slice %290 {offsets = [0, 128], sizes = [8, 128], strides = [1, 1]} : vector<8x512xf32> to vector<8x128xf32>
    %298 = arith.negf %297 : vector<8x128xf32>
    %299 = math.exp %298 : vector<8x128xf32>
    %cst_94 = arith.constant 1.000000e+00 : f32
    %300 = vector.broadcast %cst_94 : f32 to vector<8x128xf32>
    %301 = arith.addf %300, %299 : vector<8x128xf32>
    %302 = arith.divf %300, %301 : vector<8x128xf32>
    %303 = vector.extract_strided_slice %290 {offsets = [0, 256], sizes = [8, 128], strides = [1, 1]} : vector<8x512xf32> to vector<8x128xf32>
    %304 = math.tanh %303 : vector<8x128xf32>
    %305 = vector.extract_strided_slice %290 {offsets = [0, 384], sizes = [8, 128], strides = [1, 1]} : vector<8x512xf32> to vector<8x128xf32>
    %306 = arith.negf %305 : vector<8x128xf32>
    %307 = math.exp %306 : vector<8x128xf32>
    %cst_95 = arith.constant 1.000000e+00 : f32
    %308 = vector.broadcast %cst_95 : f32 to vector<8x128xf32>
    %309 = arith.addf %308, %307 : vector<8x128xf32>
    %310 = arith.divf %308, %309 : vector<8x128xf32>
    %311 = arith.mulf %302, %273 : vector<8x128xf32>
    %312 = arith.mulf %296, %304 : vector<8x128xf32>
    %313 = arith.addf %311, %312 : vector<8x128xf32>
    %314 = math.tanh %313 : vector<8x128xf32>
    %315 = arith.mulf %310, %314 : vector<8x128xf32>
    %316 = arith.index_cast %c7_i32 : i32 to index
    %c0_96 = arith.constant 0 : index
    %c0_97 = arith.constant 0 : index
    %317 = vector.load %arg2[%316, %c0_96, %c0_97] : memref<8x8x1xf32, #tpu.memory_space<vmem>>, vector<1x8x1xf32>
    %318 = vector.shape_cast %317 : vector<1x8x1xf32> to vector<8x1xf32>
    %319 = vector.broadcast %318 : vector<8x1xf32> to vector<8x128xf32>
    %320 = arith.mulf %315, %319 : vector<8x128xf32>
    %321 = arith.index_cast %c7_i32 : i32 to index
    %c0_98 = arith.constant 0 : index
    %c0_99 = arith.constant 0 : index
    %322 = vector.load %arg5[%321, %c0_98, %c0_99] : memref<8x8x128xf32, #tpu.memory_space<vmem>>, vector<1x8x128xf32>
    %323 = vector.shape_cast %322 : vector<1x8x128xf32> to vector<8x128xf32>
    %324 = vector.shape_cast %320 : vector<8x128xf32> to vector<1x8x128xf32>
    tpu.vector_store %arg5[%321, %c0_98, %c0_99], %324 {strides = array<i32>} : memref<8x8x128xf32, #tpu.memory_space<vmem>>, vector<1x8x128xf32>,
    %c8_i32 = arith.constant 8 : i32
    %c0_100 = arith.constant 0 : index
    %c0_101 = arith.constant 0 : index
    %325 = vector.load %arg6[%c0_100, %c0_101] : memref<8x128xf32, #tpu.memory_space<vmem>>, vector<8x128xf32>
    tpu.vector_store %arg6[%c0_100, %c0_101], %315 {strides = array<i32>} : memref<8x128xf32, #tpu.memory_space<vmem>>, vector<8x128xf32>,
    %c0_102 = arith.constant 0 : index
    %c0_103 = arith.constant 0 : index
    %326 = vector.load %arg7[%c0_102, %c0_103] : memref<8x128xf32, #tpu.memory_space<vmem>>, vector<8x128xf32>
    tpu.vector_store %arg7[%c0_102, %c0_103], %313 {strides = array<i32>} : memref<8x128xf32, #tpu.memory_space<vmem>>, vector<8x128xf32>,
    return
  }
  func.func @transform_0(%arg0: i32, %arg1: i32) -> (i32, i32, i32) {
    %c0_i32 = arith.constant 0 : i32
    %c0_i32_0 = arith.constant 0 : i32
    return %arg1, %arg0, %c0_i32 : i32, i32, i32
  }
  func.func @transform_1(%arg0: i32, %arg1: i32) -> (i32, i32, i32) {
    %c0_i32 = arith.constant 0 : i32
    %c0_i32_0 = arith.constant 0 : i32
    return %arg1, %arg0, %c0_i32 : i32, i32, i32
  }
  func.func @transform_2(%arg0: i32, %arg1: i32) -> (i32, i32) {
    %c0_i32 = arith.constant 0 : i32
    %c0_i32_0 = arith.constant 0 : i32
    %c0_i32_1 = arith.constant 0 : i32
    return %c0_i32, %c0_i32_0 : i32, i32
  }
  func.func @transform_3(%arg0: i32, %arg1: i32) -> (i32, i32, i32) {
    %c0_i32 = arith.constant 0 : i32
    %c0_i32_0 = arith.constant 0 : i32
    return %arg1, %arg0, %c0_i32 : i32, i32, i32
  }
}

</mosaic_0001>

<llo_original>
// kernel: seq2seq_encoder_forward.1
$region0: #{seq2seq_encoder_forward.1}
  #allocation0 [shape = 'u32[]', space=smem, size = 0x4, offset = 0x4, fixed_abs, tag = 'smem constant byte address 0x4 - core index']
  #allocation1 [shape = 'u32[72,128]{1,0:T(1,128)}', space=vmem, size = 0x9000, scoped, tag = 'internal scratch']
  #allocation2 [shape = 'f32[8,128]{1,0:T(8,128)}', space=vmem, size = 0x1000, scoped, tag = 'scratch operand']
  #allocation3 [shape = 'f32[8,128]{1,0:T(8,128)}', space=vmem, size = 0x1000, scoped, tag = 'scratch operand']
  %s0 = inlined_call_operand.vmem [shape: f32[8,8,1], index: 0, kind: input, shape index: {}]
  %s1 = inlined_call_operand.vmem [shape: f32[8,8,512], index: 1, kind: input, shape index: {}]
  %s2 = inlined_call_operand.vmem [shape: f32[128,512], index: 2, kind: input, shape index: {}]
  %s3 = inlined_call_operand.vmem [shape: f32[8,8,128], index: 3, kind: output, shape index: {}]
  %s4 = sld [smem:[#allocation0]]
  $region26: #{seq2seq_encoder_forward.1} parent=0
    _
  %s6 = ssub.s32 1, %s4
  %s7 = scalar_select 0, %s6, %s4
  // Predicated region
  $region2: #{seq2seq_encoder_forward.1} parent=0 // pred_check
    _
  $region3: #{seq2seq_encoder_forward.1} parent=0 // pred_check_branch
    %9 = sbr.rel (0) target = $region5
  $region4: #{seq2seq_encoder_forward.1} parent=0 // pred_region
    _
  $region5: #{seq2seq_encoder_forward.1} parent=0 // pred_fallthru
    _
  // Predicated region
  $region6: #{seq2seq_encoder_forward.1} parent=0 // pred_check
    _
  $region7: #{seq2seq_encoder_forward.1} parent=0 // pred_check_branch
    %11 = sbr.rel (0) target = $region9
  $region8: #{seq2seq_encoder_forward.1} parent=0 // pred_region
    _
  $region9: #{seq2seq_encoder_forward.1} parent=0 // pred_fallthru
    _
  // Predicated region
  $region10: #{seq2seq_encoder_forward.1} parent=0 // pred_check
    _
  $region11: #{seq2seq_encoder_forward.1} parent=0 // pred_check_branch
    %13 = sbr.rel (0) target = $region13
  $region12: #{seq2seq_encoder_forward.1} parent=0 // pred_region
    _
  $region13: #{seq2seq_encoder_forward.1} parent=0 // pred_fallthru
    _
  %p14 = scmp.eq.s32.totalorder 0, 0
  // Predicated region
  $region14: #{seq2seq_encoder_forward.1} parent=0 // pred_check
    %p15 = pneg %p14
  $region15: #{seq2seq_encoder_forward.1} parent=0 // pred_check_branch
    %17 = sbr.rel (%p15) target = $region17
  $region16: #{seq2seq_encoder_forward.1} parent=0 // pred_region
    %18 = vst [vmem:[#allocation2] sm:$0xff] 0.0
    %19 = vst [vmem:[#allocation3] sm:$0xff] 0.0
  $region17: #{seq2seq_encoder_forward.1} parent=0 // pred_fallthru
    _
  %v20 = vld [vmem:[#allocation2] sm:$0xff]
  %v21 = vld [vmem:[#allocation3] sm:$0xff]
  %v22 = vld [vmem:[%s1] sm:$0xff]
  %v23 = vld [vmem:[%s1 + $0x8] sm:$0xff]
  %v24 = vld [vmem:[%s1 + $0x10] sm:$0xff]
  %v25 = vld [vmem:[%s1 + $0x18] sm:$0xff]
  %v26 = vld [vmem:[%s2] sm:$0xff]
  %v27 = vld [vmem:[%s2 + $0x8] sm:$0xff]
  %v28 = vld [vmem:[%s2 + $0x10] sm:$0xff]
  %v29 = vld [vmem:[%s2 + $0x18] sm:$0xff]
  %v30 = vld [vmem:[%s2 + $0x20] sm:$0xff]
  %v31 = vld [vmem:[%s2 + $0x28] sm:$0xff]
  %v32 = vld [vmem:[%s2 + $0x30] sm:$0xff]
  %v33 = vld [vmem:[%s2 + $0x38] sm:$0xff]
  %v34 = vld [vmem:[%s2 + $0x40] sm:$0xff]
  %v35 = vld [vmem:[%s2 + $0x48] sm:$0xff]
  %v36 = vld [vmem:[%s2 + $0x50] sm:$0xff]
  %v37 = vld [vmem:[%s2 + $0x58] sm:$0xff]
  %v38 = vld [vmem:[%s2 + $0x60] sm:$0xff]
  %v39 = vld [vmem:[%s2 + $0x68] sm:$0xff]
  %v40 = vld [vmem:[%s2 + $0x70] sm:$0xff]
  %v41 = vld [vmem:[%s2 + $0x78] sm:$0xff]
  %v42 = vld [vmem:[%s2 + $0x80] sm:$0xff]
  %v43 = vld [vmem:[%s2 + $0x88] sm:$0xff]
  %v44 = vld [vmem:[%s2 + $0x90] sm:$0xff]
  %v45 = vld [vmem:[%s2 + $0x98] sm:$0xff]
  %v46 = vld [vmem:[%s2 + $0xa0] sm:$0xff]
  %v47 = vld [vmem:[%s2 + $0xa8] sm:$0xff]
  %v48 = vld [vmem:[%s2 + $0xb0] sm:$0xff]
  %v49 = vld [vmem:[%s2 + $0xb8] sm:$0xff]
  %v50 = vld [vmem:[%s2 + $0xc0] sm:$0xff]
  %v51 = vld [vmem:[%s2 + $0xc8] sm:$0xff]
  %v52 = vld [vmem:[%s2 + $0xd0] sm:$0xff]
  %v53 = vld [vmem:[%s2 + $0xd8] sm:$0xff]
  %v54 = vld [vmem:[%s2 + $0xe0] sm:$0xff]
  %v55 = vld [vmem:[%s2 + $0xe8] sm:$0xff]
  %v56 = vld [vmem:[%s2 + $0xf0] sm:$0xff]
  %v57 = vld [vmem:[%s2 + $0xf8] sm:$0xff]
  %v58 = vld [vmem:[%s2 + $0x100] sm:$0xff]
  %v59 = vld [vmem:[%s2 + $0x108] sm:$0xff]
  %v60 = vld [vmem:[%s2 + $0x110] sm:$0xff]
  %v61 = vld [vmem:[%s2 + $0x118] sm:$0xff]
  %v62 = vld [vmem:[%s2 + $0x120] sm:$0xff]
  %v63 = vld [vmem:[%s2 + $0x128] sm:$0xff]
  %v64 = vld [vmem:[%s2 + $0x130] sm:$0xff]
  %v65 = vld [vmem:[%s2 + $0x138] sm:$0xff]
  %v66 = vld [vmem:[%s2 + $0x140] sm:$0xff]
  %v67 = vld [vmem:[%s2 + $0x148] sm:$0xff]
  %v68 = vld [vmem:[%s2 + $0x150] sm:$0xff]
  %v69 = vld [vmem:[%s2 + $0x158] sm:$0xff]
  %v70 = vld [vmem:[%s2 + $0x160] sm:$0xff]
  %v71 = vld [vmem:[%s2 + $0x168] sm:$0xff]
  %v72 = vld [vmem:[%s2 + $0x170] sm:$0xff]
  %v73 = vld [vmem:[%s2 + $0x178] sm:$0xff]
  %v74 = vld [vmem:[%s2 + $0x180] sm:$0xff]
  %v75 = vld [vmem:[%s2 + $0x188] sm:$0xff]
  %v76 = vld [vmem:[%s2 + $0x190] sm:$0xff]
  %v77 = vld [vmem:[%s2 + $0x198] sm:$0xff]
  %v78 = vld [vmem:[%s2 + $0x1a0] sm:$0xff]
  %v79 = vld [vmem:[%s2 + $0x1a8] sm:$0xff]
  %v80 = vld [vmem:[%s2 + $0x1b0] sm:$0xff]
  %v81 = vld [vmem:[%s2 + $0x1b8] sm:$0xff]
  %v82 = vld [vmem:[%s2 + $0x1c0] sm:$0xff]
  %v83 = vld [vmem:[%s2 + $0x1c8] sm:$0xff]
  %v84 = vld [vmem:[%s2 + $0x1d0] sm:$0xff]
  %v85 = vld [vmem:[%s2 + $0x1d8] sm:$0xff]
  %v86 = vld [vmem:[%s2 + $0x1e0] sm:$0xff]
  %v87 = vld [vmem:[%s2 + $0x1e8] sm:$0xff]
  %v88 = vld [vmem:[%s2 + $0x1f0] sm:$0xff]
  %v89 = vld [vmem:[%s2 + $0x1f8] sm:$0xff]
  %90 = vmatpush.msra.mxu0 %v86
  %91 = vmatpush.msra.mxu0 %v82
  %92 = vmatpush.msra.mxu0 %v78
  %93 = vmatpush.msra.mxu0 %v74
  %94 = vmatpush.msra.mxu0 %v70
  %95 = vmatpush.msra.mxu0 %v66
  %96 = vmatpush.msra.mxu0 %v62
  %97 = vmatpush.msra.mxu0 %v58
  %98 = vmatpush.msra.mxu0 %v54
  %99 = vmatpush.msra.mxu0 %v50
  %100 = vmatpush.msra.mxu0 %v46
  %101 = vmatpush.msra.mxu0 %v42
  %102 = vmatpush.msra.mxu0 %v38
  %103 = vmatpush.msra.mxu0 %v34
  %104 = vmatpush.msra.mxu0 %v30
  %105 = vmatpush.msra.mxu0 %v26
  %106 = vmatmul.f32.gmra.mxu0 %v20
  %v107 = vpop.f32.mrf.mxu0
  %v108 = vadd.f32 0.0, %v107
  %109 = vdwg.mxu0
  %110 = vmatpush.msra.mxu0 %v87
  %111 = vmatpush.msra.mxu0 %v83
  %112 = vmatpush.msra.mxu0 %v79
  %113 = vmatpush.msra.mxu0 %v75
  %114 = vmatpush.msra.mxu0 %v71
  %115 = vmatpush.msra.mxu0 %v67
  %116 = vmatpush.msra.mxu0 %v63
  %117 = vmatpush.msra.mxu0 %v59
  %118 = vmatpush.msra.mxu0 %v55
  %119 = vmatpush.msra.mxu0 %v51
  %120 = vmatpush.msra.mxu0 %v47
  %121 = vmatpush.msra.mxu0 %v43
  %122 = vmatpush.msra.mxu0 %v39
  %123 = vmatpush.msra.mxu0 %v35
  %124 = vmatpush.msra.mxu0 %v31
  %125 = vmatpush.msra.mxu0 %v27
  %126 = vmatmul.f32.gmra.mxu0 %v20
  %v127 = vpop.f32.mrf.mxu0
  %v128 = vadd.f32 0.0, %v127
  %129 = vdwg.mxu0
  %130 = vmatpush.msra.mxu0 %v88
  %131 = vmatpush.msra.mxu0 %v84
  %132 = vmatpush.msra.mxu0 %v80
  %133 = vmatpush.msra.mxu0 %v76
  %134 = vmatpush.msra.mxu0 %v72
  %135 = vmatpush.msra.mxu0 %v68
  %136 = vmatpush.msra.mxu0 %v64
  %137 = vmatpush.msra.mxu0 %v60
  %138 = vmatpush.msra.mxu0 %v56
  %139 = vmatpush.msra.mxu0 %v52
  %140 = vmatpush.msra.mxu0 %v48
  %141 = vmatpush.msra.mxu0 %v44
  %142 = vmatpush.msra.mxu0 %v40
  %143 = vmatpush.msra.mxu0 %v36
  %144 = vmatpush.msra.mxu0 %v32
  %145 = vmatpush.msra.mxu0 %v28
  %146 = vmatmul.f32.gmra.mxu0 %v20
  %v147 = vpop.f32.mrf.mxu0
  %v148 = vadd.f32 0.0, %v147
  %149 = vdwg.mxu0
  %150 = vmatpush.msra.mxu0 %v89
  %151 = vmatpush.msra.mxu0 %v85
  %152 = vmatpush.msra.mxu0 %v81
  %153 = vmatpush.msra.mxu0 %v77
  %154 = vmatpush.msra.mxu0 %v73
  %155 = vmatpush.msra.mxu0 %v69
  %156 = vmatpush.msra.mxu0 %v65
  %157 = vmatpush.msra.mxu0 %v61
  %158 = vmatpush.msra.mxu0 %v57
  %159 = vmatpush.msra.mxu0 %v53
  %160 = vmatpush.msra.mxu0 %v49
  %161 = vmatpush.msra.mxu0 %v45
  %162 = vmatpush.msra.mxu0 %v41
  %163 = vmatpush.msra.mxu0 %v37
  %164 = vmatpush.msra.mxu0 %v33
  %165 = vmatpush.msra.mxu0 %v29
  %166 = vmatmul.f32.gmra.mxu0 %v20
  %v167 = vpop.f32.mrf.mxu0
  %v168 = vadd.f32 0.0, %v167
  %169 = vdwg.mxu0
  %v170 = vadd.f32 %v22, %v108
  %v171 = vadd.f32 %v23, %v128
  %v172 = vadd.f32 %v24, %v148
  %v173 = vadd.f32 %v25, %v168
  %v174 = vxor.u32 %v170, 2147483648
  %v175 = vmul.f32 %v174, 1.442695
  %v176 = vpow.pop %v175
  %v177 = vadd.f32 %v176, 1.0
  %v178 = vrcp.pop %v177
  %v179 = vmul.f32 %v177, %v178
  %v180 = vsub.f32 1.0, %v179
  %v181 = vmul.f32 %v178, %v180
  %v182 = vadd.f32 %v178, %v181
  %vm183 = vweird.f32 %v177
  %vm184 = vweird.f32 %v178
  %vm185 = vmor %vm183, %vm184
  %v186 = vsel %vm185, %v178, %v182
  %v187 = vand.u32 2147483647, %v177
  %vm188 = vcmp.eq.f32.partialorder %v187, 8.507059e+37
  %v189 = vand.u32 %v177, 2147483648
  %v190 = vor.u32 1.1754944e-38, %v189
  %v191 = vsel %vm188, %v190, %v186
  %v192 = vmul.f32 1.0, %v191
  %v193 = vxor.u32 %v171, 2147483648
  %v194 = vmul.f32 %v193, 1.442695
  %v195 = vpow.pop %v194
  %v196 = vadd.f32 %v195, 1.0
  %v197 = vrcp.pop %v196
  %v198 = vmul.f32 %v196, %v197
  %v199 = vsub.f32 1.0, %v198
  %v200 = vmul.f32 %v197, %v199
  %v201 = vadd.f32 %v197, %v200
  %vm202 = vweird.f32 %v196
  %vm203 = vweird.f32 %v197
  %vm204 = vmor %vm202, %vm203
  %v205 = vsel %vm204, %v197, %v201
  %v206 = vand.u32 2147483647, %v196
  %vm207 = vcmp.eq.f32.partialorder %v206, 8.507059e+37
  %v208 = vand.u32 %v196, 2147483648
  %v209 = vor.u32 1.1754944e-38, %v208
  %v210 = vsel %vm207, %v209, %v205
  %v211 = vmul.f32 1.0, %v210
  %v212 = vtanh.pop %v172
  %v213 = vxor.u32 %v173, 2147483648
  %v214 = vmul.f32 %v213, 1.442695
  %v215 = vpow.pop %v214
  %v216 = vadd.f32 %v215, 1.0
  %v217 = vrcp.pop %v216
  %v218 = vmul.f32 %v216, %v217
  %v219 = vsub.f32 1.0, %v218
  %v220 = vmul.f32 %v217, %v219
  %v221 = vadd.f32 %v217, %v220
  %vm222 = vweird.f32 %v216
  %vm223 = vweird.f32 %v217
  %vm224 = vmor %vm222, %vm223
  %v225 = vsel %vm224, %v217, %v221
  %v226 = vand.u32 2147483647, %v216
  %vm227 = vcmp.eq.f32.partialorder %v226, 8.507059e+37
  %v228 = vand.u32 %v216, 2147483648
  %v229 = vor.u32 1.1754944e-38, %v228
  %v230 = vsel %vm227, %v229, %v225
  %v231 = vmul.f32 1.0, %v230
  %v232 = vmul.f32 %v211, %v21
  %v233 = vmul.f32 %v192, %v212
  %v234 = vadd.f32 %v232, %v233
  %v235 = vtanh.pop %v234
  %v236 = vmul.f32 %v231, %v235
  %v237 = vld [vmem:[%s0] sm:$0xff]
  %239 = vset.pattern.permute.xlu0 0
  %240 = vperm.xlu0 %239, %v237
  %v241 = vpop.permute.xlu0 %240
  %v243 = vmul.f32 %v236, %v241
  %244 = vst [vmem:[%s3] sm:$0xff] %v243
  %s245 = scalar_lea.vmem %s1, 32
  %v246 = vld [vmem:[%s245] sm:$0xff]
  %v247 = vld [vmem:[%s245 + $0x8] sm:$0xff]
  %v248 = vld [vmem:[%s245 + $0x10] sm:$0xff]
  %v249 = vld [vmem:[%s245 + $0x18] sm:$0xff]
  %v250 = vld [vmem:[%s2] sm:$0xff]
  %v251 = vld [vmem:[%s2 + $0x8] sm:$0xff]
  %v252 = vld [vmem:[%s2 + $0x10] sm:$0xff]
  %v253 = vld [vmem:[%s2 + $0x18] sm:$0xff]
  %v254 = vld [vmem:[%s2 + $0x20] sm:$0xff]
  %v255 = vld [vmem:[%s2 + $0x28] sm:$0xff]
  %v256 = vld [vmem:[%s2 + $0x30] sm:$0xff]
  %v257 = vld [vmem:[%s2 + $0x38] sm:$0xff]
  %v258 = vld [vmem:[%s2 + $0x40] sm:$0xff]
  %v259 = vld [vmem:[%s2 + $0x48] sm:$0xff]
  %v260 = vld [vmem:[%s2 + $0x50] sm:$0xff]
  %v261 = vld [vmem:[%s2 + $0x58] sm:$0xff]
  %v262 = vld [vmem:[%s2 + $0x60] sm:$0xff]
  %v263 = vld [vmem:[%s2 + $0x68] sm:$0xff]
  %v264 = vld [vmem:[%s2 + $0x70] sm:$0xff]
  %v265 = vld [vmem:[%s2 + $0x78] sm:$0xff]
  %v266 = vld [vmem:[%s2 + $0x80] sm:$0xff]
  %v267 = vld [vmem:[%s2 + $0x88] sm:$0xff]
  %v268 = vld [vmem:[%s2 + $0x90] sm:$0xff]
  %v269 = vld [vmem:[%s2 + $0x98] sm:$0xff]
  %v270 = vld [vmem:[%s2 + $0xa0] sm:$0xff]
  %v271 = vld [vmem:[%s2 + $0xa8] sm:$0xff]
  %v272 = vld [vmem:[%s2 + $0xb0] sm:$0xff]
  %v273 = vld [vmem:[%s2 + $0xb8] sm:$0xff]
  %v274 = vld [vmem:[%s2 + $0xc0] sm:$0xff]
  %v275 = vld [vmem:[%s2 + $0xc8] sm:$0xff]
  %v276 = vld [vmem:[%s2 + $0xd0] sm:$0xff]
  %v277 = vld [vmem:[%s2 + $0xd8] sm:$0xff]
  %v278 = vld [vmem:[%s2 + $0xe0] sm:$0xff]
  %v279 = vld [vmem:[%s2 + $0xe8] sm:$0xff]
  %v280 = vld [vmem:[%s2 + $0xf0] sm:$0xff]
  %v281 = vld [vmem:[%s2 + $0xf8] sm:$0xff]
  %v282 = vld [vmem:[%s2 + $0x100] sm:$0xff]
  %v283 = vld [vmem:[%s2 + $0x108] sm:$0xff]
  %v284 = vld [vmem:[%s2 + $0x110] sm:$0xff]
  %v285 = vld [vmem:[%s2 + $0x118] sm:$0xff]
  %v286 = vld [vmem:[%s2 + $0x120] sm:$0xff]
  %v287 = vld [vmem:[%s2 + $0x128] sm:$0xff]
  %v288 = vld [vmem:[%s2 + $0x130] sm:$0xff]
  %v289 = vld [vmem:[%s2 + $0x138] sm:$0xff]
  %v290 = vld [vmem:[%s2 + $0x140] sm:$0xff]
  %v291 = vld [vmem:[%s2 + $0x148] sm:$0xff]
  %v292 = vld [vmem:[%s2 + $0x150] sm:$0xff]
  %v293 = vld [vmem:[%s2 + $0x158] sm:$0xff]
  %v294 = vld [vmem:[%s2 + $0x160] sm:$0xff]
  %v295 = vld [vmem:[%s2 + $0x168] sm:$0xff]
  %v296 = vld [vmem:[%s2 + $0x170] sm:$0xff]
  %v297 = vld [vmem:[%s2 + $0x178] sm:$0xff]
  %v298 = vld [vmem:[%s2 + $0x180] sm:$0xff]
  %v299 = vld [vmem:[%s2 + $0x188] sm:$0xff]
  %v300 = vld [vmem:[%s2 + $0x190] sm:$0xff]
  %v301 = vld [vmem:[%s2 + $0x198] sm:$0xff]
  %v302 = vld [vmem:[%s2 + $0x1a0] sm:$0xff]
  %v303 = vld [vmem:[%s2 + $0x1a8] sm:$0xff]
  %v304 = vld [vmem:[%s2 + $0x1b0] sm:$0xff]
  %v305 = vld [vmem:[%s2 + $0x1b8] sm:$0xff]
  %v306 = vld [vmem:[%s2 + $0x1c0] sm:$0xff]
  %v307 = vld [vmem:[%s2 + $0x1c8] sm:$0xff]
  %v308 = vld [vmem:[%s2 + $0x1d0] sm:$0xff]
  %v309 = vld [vmem:[%s2 + $0x1d8] sm:$0xff]
  %v310 = vld [vmem:[%s2 + $0x1e0] sm:$0xff]
  %v311 = vld [vmem:[%s2 + $0x1e8] sm:$0xff]
  %v312 = vld [vmem:[%s2 + $0x1f0] sm:$0xff]
  %v313 = vld [vmem:[%s2 + $0x1f8] sm:$0xff]
  %314 = vmatpush.msra.mxu0 %v310
  %315 = vmatpush.msra.mxu0 %v306
  %316 = vmatpush.msra.mxu0 %v302
  %317 = vmatpush.msra.mxu0 %v298
  %318 = vmatpush.msra.mxu0 %v294
  %319 = vmatpush.msra.mxu0 %v290
  %320 = vmatpush.msra.mxu0 %v286
  %321 = vmatpush.msra.mxu0 %v282
  %322 = vmatpush.msra.mxu0 %v278
  %323 = vmatpush.msra.mxu0 %v274
  %324 = vmatpush.msra.mxu0 %v270
  %325 = vmatpush.msra.mxu0 %v266
  %326 = vmatpush.msra.mxu0 %v262
  %327 = vmatpush.msra.mxu0 %v258
  %328 = vmatpush.msra.mxu0 %v254
  %329 = vmatpush.msra.mxu0 %v250
  %330 = vmatmul.f32.gmra.mxu0 %v236
  %v331 = vpop.f32.mrf.mxu0
  %v332 = vadd.f32 0.0, %v331
  %333 = vdwg.mxu0
  %334 = vmatpush.msra.mxu0 %v311
  %335 = vmatpush.msra.mxu0 %v307
  %336 = vmatpush.msra.mxu0 %v303
  %337 = vmatpush.msra.mxu0 %v299
  %338 = vmatpush.msra.mxu0 %v295
  %339 = vmatpush.msra.mxu0 %v291
  %340 = vmatpush.msra.mxu0 %v287
  %341 = vmatpush.msra.mxu0 %v283
  %342 = vmatpush.msra.mxu0 %v279
  %343 = vmatpush.msra.mxu0 %v275
  %344 = vmatpush.msra.mxu0 %v271
  %345 = vmatpush.msra.mxu0 %v267
  %346 = vmatpush.msra.mxu0 %v263
  %347 = vmatpush.msra.mxu0 %v259
  %348 = vmatpush.msra.mxu0 %v255
  %349 = vmatpush.msra.mxu0 %v251
  %350 = vmatmul.f32.gmra.mxu0 %v236
  %v351 = vpop.f32.mrf.mxu0
  %v352 = vadd.f32 0.0, %v351
  %353 = vdwg.mxu0
  %354 = vmatpush.msra.mxu0 %v312
  %355 = vmatpush.msra.mxu0 %v308
  %356 = vmatpush.msra.mxu0 %v304
  %357 = vmatpush.msra.mxu0 %v300
  %358 = vmatpush.msra.mxu0 %v296
  %359 = vmatpush.msra.mxu0 %v292
  %360 = vmatpush.msra.mxu0 %v288
  %361 = vmatpush.msra.mxu0 %v284
  %362 = vmatpush.msra.mxu0 %v280
  %363 = vmatpush.msra.mxu0 %v276
  %364 = vmatpush.msra.mxu0 %v272
  %365 = vmatpush.msra.mxu0 %v268
  %366 = vmatpush.msra.mxu0 %v264
  %367 = vmatpush.msra.mxu0 %v260
  %368 = vmatpush.msra.mxu0 %v256
  %369 = vmatpush.msra.mxu0 %v252
  %370 = vmatmul.f32.gmra.mxu0 %v236
  %v371 = vpop.f32.mrf.mxu0
  %v372 = vadd.f32 0.0, %v371
  %373 = vdwg.mxu0
  %374 = vmatpush.msra.mxu0 %v313
  %375 = vmatpush.msra.mxu0 %v309
  %376 = vmatpush.msra.mxu0 %v305
  %377 = vmatpush.msra.mxu0 %v301
  %378 = vmatpush.msra.mxu0 %v297
  %379 = vmatpush.msra.mxu0 %v293
  %380 = vmatpush.msra.mxu0 %v289
  %381 = vmatpush.msra.mxu0 %v285
  %382 = vmatpush.msra.mxu0 %v281
  %383 = vmatpush.msra.mxu0 %v277
  %384 = vmatpush.msra.mxu0 %v273
  %385 = vmatpush.msra.mxu0 %v269
  %386 = vmatpush.msra.mxu0 %v265
  %387 = vmatpush.msra.mxu0 %v261
  %388 = vmatpush.msra.mxu0 %v257
  %389 = vmatpush.msra.mxu0 %v253
  %390 = vmatmul.f32.gmra.mxu0 %v236
  %v391 = vpop.f32.mrf.mxu0
  %v392 = vadd.f32 0.0, %v391
  %393 = vdwg.mxu0
  %v394 = vadd.f32 %v246, %v332
  %v395 = vadd.f32 %v247, %v352
  %v396 = vadd.f32 %v248, %v372
  %v397 = vadd.f32 %v249, %v392
  %v398 = vxor.u32 %v394, 2147483648
  %v399 = vmul.f32 %v398, 1.442695
  %v400 = vpow.pop %v399
  %v401 = vadd.f32 %v400, 1.0
  %v402 = vrcp.pop %v401
  %v403 = vmul.f32 %v401, %v402
  %v404 = vsub.f32 1.0, %v403
  %v405 = vmul.f32 %v402, %v404
  %v406 = vadd.f32 %v402, %v405
  %vm407 = vweird.f32 %v401
  %vm408 = vweird.f32 %v402
  %vm409 = vmor %vm407, %vm408
  %v410 = vsel %vm409, %v402, %v406
  %v411 = vand.u32 2147483647, %v401
  %vm412 = vcmp.eq.f32.partialorder %v411, 8.507059e+37
  %v413 = vand.u32 %v401, 2147483648
  %v414 = vor.u32 1.1754944e-38, %v413
  %v415 = vsel %vm412, %v414, %v410
  %v416 = vmul.f32 1.0, %v415
  %v417 = vxor.u32 %v395, 2147483648
  %v418 = vmul.f32 %v417, 1.442695
  %v419 = vpow.pop %v418
  %v420 = vadd.f32 %v419, 1.0
  %v421 = vrcp.pop %v420
  %v422 = vmul.f32 %v420, %v421
  %v423 = vsub.f32 1.0, %v422
  %v424 = vmul.f32 %v421, %v423
  %v425 = vadd.f32 %v421, %v424
  %vm426 = vweird.f32 %v420
  %vm427 = vweird.f32 %v421
  %vm428 = vmor %vm426, %vm427
  %v429 = vsel %vm428, %v421, %v425
  %v430 = vand.u32 2147483647, %v420
  %vm431 = vcmp.eq.f32.partialorder %v430, 8.507059e+37
  %v432 = vand.u32 %v420, 2147483648
  %v433 = vor.u32 1.1754944e-38, %v432
  %v434 = vsel %vm431, %v433, %v429
  %v435 = vmul.f32 1.0, %v434
  %v436 = vtanh.pop %v396
  %v437 = vxor.u32 %v397, 2147483648
  %v438 = vmul.f32 %v437, 1.442695
  %v439 = vpow.pop %v438
  %v440 = vadd.f32 %v439, 1.0
  %v441 = vrcp.pop %v440
  %v442 = vmul.f32 %v440, %v441
  %v443 = vsub.f32 1.0, %v442
  %v444 = vmul.f32 %v441, %v443
  %v445 = vadd.f32 %v441, %v444
  %vm446 = vweird.f32 %v440
  %vm447 = vweird.f32 %v441
  %vm448 = vmor %vm446, %vm447
  %v449 = vsel %vm448, %v441, %v445
  %v450 = vand.u32 2147483647, %v440
  %vm451 = vcmp.eq.f32.partialorder %v450, 8.507059e+37
  %v452 = vand.u32 %v440, 2147483648
  %v453 = vor.u32 1.1754944e-38, %v452
  %v454 = vsel %vm451, %v453, %v449
  %v455 = vmul.f32 1.0, %v454
  %v456 = vmul.f32 %v435, %v234
  %v457 = vmul.f32 %v416, %v436
  %v458 = vadd.f32 %v456, %v457
  %v459 = vtanh.pop %v458
  %v460 = vmul.f32 %v455, %v459
  %s461 = scalar_lea.vmem %s0, 8
  %v462 = vld [vmem:[%s461] sm:$0xff]
  %464 = vset.pattern.permute.xlu0 0
  %465 = vperm.xlu0 %464, %v462
  %v466 = vpop.permute.xlu0 %465
  %v468 = vmul.f32 %v460, %v466
  %s469 = scalar_lea.vmem %s3, 8
  %470 = vst [vmem:[%s469] sm:$0xff] %v468
  %s471 = scalar_lea.vmem %s1, 64
  %v472 = vld [vmem:[%s471] sm:$0xff]
  %v473 = vld [vmem:[%s471 + $0x8] sm:$0xff]
  %v474 = vld [vmem:[%s471 + $0x10] sm:$0xff]
  %v475 = vld [vmem:[%s471 + $0x18] sm:$0xff]
  %v476 = vld [vmem:[%s2] sm:$0xff]
  %v477 = vld [vmem:[%s2 + $0x8] sm:$0xff]
  %v478 = vld [vmem:[%s2 + $0x10] sm:$0xff]
  %v479 = vld [vmem:[%s2 + $0x18] sm:$0xff]
  %v480 = vld [vmem:[%s2 + $0x20] sm:$0xff]
  %v481 = vld [vmem:[%s2 + $0x28] sm:$0xff]
  %v482 = vld [vmem:[%s2 + $0x30] sm:$0xff]
  %v483 = vld [vmem:[%s2 + $0x38] sm:$0xff]
  %v484 = vld [vmem:[%s2 + $0x40] sm:$0xff]
  %v485 = vld [vmem:[%s2 + $0x48] sm:$0xff]
  %v486 = vld [vmem:[%s2 + $0x50] sm:$0xff]
  %v487 = vld [vmem:[%s2 + $0x58] sm:$0xff]
  %v488 = vld [vmem:[%s2 + $0x60] sm:$0xff]
  %v489 = vld [vmem:[%s2 + $0x68] sm:$0xff]
  %v490 = vld [vmem:[%s2 + $0x70] sm:$0xff]
  %v491 = vld [vmem:[%s2 + $0x78] sm:$0xff]
  %v492 = vld [vmem:[%s2 + $0x80] sm:$0xff]
  %v493 = vld [vmem:[%s2 + $0x88] sm:$0xff]
  %v494 = vld [vmem:[%s2 + $0x90] sm:$0xff]
  %v495 = vld [vmem:[%s2 + $0x98] sm:$0xff]
  %v496 = vld [vmem:[%s2 + $0xa0] sm:$0xff]
  %v497 = vld [vmem:[%s2 + $0xa8] sm:$0xff]
  %v498 = vld [vmem:[%s2 + $0xb0] sm:$0xff]
  %v499 = vld [vmem:[%s2 + $0xb8] sm:$0xff]
  %v500 = vld [vmem:[%s2 + $0xc0] sm:$0xff]
  %v501 = vld [vmem:[%s2 + $0xc8] sm:$0xff]
  %v502 = vld [vmem:[%s2 + $0xd0] sm:$0xff]
  %v503 = vld [vmem:[%s2 + $0xd8] sm:$0xff]
  %v504 = vld [vmem:[%s2 + $0xe0] sm:$0xff]
  %v505 = vld [vmem:[%s2 + $0xe8] sm:$0xff]
  %v506 = vld [vmem:[%s2 + $0xf0] sm:$0xff]
  %v507 = vld [vmem:[%s2 + $0xf8] sm:$0xff]
  %v508 = vld [vmem:[%s2 + $0x100] sm:$0xff]
  %v509 = vld [vmem:[%s2 + $0x108] sm:$0xff]
  %v510 = vld [vmem:[%s2 + $0x110] sm:$0xff]
  %v511 = vld [vmem:[%s2 + $0x118] sm:$0xff]
  %v512 = vld [vmem:[%s2 + $0x120] sm:$0xff]
  %v513 = vld [vmem:[%s2 + $0x128] sm:$0xff]
  %v514 = vld [vmem:[%s2 + $0x130] sm:$0xff]
  %v515 = vld [vmem:[%s2 + $0x138] sm:$0xff]
  %v516 = vld [vmem:[%s2 + $0x140] sm:$0xff]
  %v517 = vld [vmem:[%s2 + $0x148] sm:$0xff]
  %v518 = vld [vmem:[%s2 + $0x150] sm:$0xff]
  %v519 = vld [vmem:[%s2 + $0x158] sm:$0xff]
  %v520 = vld [vmem:[%s2 + $0x160] sm:$0xff]
  %v521 = vld [vmem:[%s2 + $0x168] sm:$0xff]
  %v522 = vld [vmem:[%s2 + $0x170] sm:$0xff]
  %v523 = vld [vmem:[%s2 + $0x178] sm:$0xff]
  %v524 = vld [vmem:[%s2 + $0x180] sm:$0xff]
  %v525 = vld [vmem:[%s2 + $0x188] sm:$0xff]
  %v526 = vld [vmem:[%s2 + $0x190] sm:$0xff]
  %v527 = vld [vmem:[%s2 + $0x198] sm:$0xff]
  %v528 = vld [vmem:[%s2 + $0x1a0] sm:$0xff]
  %v529 = vld [vmem:[%s2 + $0x1a8] sm:$0xff]
  %v530 = vld [vmem:[%s2 + $0x1b0] sm:$0xff]
  %v531 = vld [vmem:[%s2 + $0x1b8] sm:$0xff]
  %v532 = vld [vmem:[%s2 + $0x1c0] sm:$0xff]
  %v533 = vld [vmem:[%s2 + $0x1c8] sm:$0xff]
  %v534 = vld [vmem:[%s2 + $0x1d0] sm:$0xff]
  %v535 = vld [vmem:[%s2 + $0x1d8] sm:$0xff]
  %v536 = vld [vmem:[%s2 + $0x1e0] sm:$0xff]
  %v537 = vld [vmem:[%s2 + $0x1e8] sm:$0xff]
  %v538 = vld [vmem:[%s2 + $0x1f0] sm:$0xff]
  %v539 = vld [vmem:[%s2 + $0x1f8] sm:$0xff]
  %540 = vmatpush.msra.mxu0 %v536
  %541 = vmatpush.msra.mxu0 %v532
  %542 = vmatpush.msra.mxu0 %v528
  %543 = vmatpush.msra.mxu0 %v524
  %544 = vmatpush.msra.mxu0 %v520
  %545 = vmatpush.msra.mxu0 %v516
  %546 = vmatpush.msra.mxu0 %v512
  %547 = vmatpush.msra.mxu0 %v508
  %548 = vmatpush.msra.mxu0 %v504
  %549 = vmatpush.msra.mxu0 %v500
  %550 = vmatpush.msra.mxu0 %v496
  %551 = vmatpush.msra.mxu0 %v492
  %552 = vmatpush.msra.mxu0 %v488
  %553 = vmatpush.msra.mxu0 %v484
  %554 = vmatpush.msra.mxu0 %v480
  %555 = vmatpush.msra.mxu0 %v476
  %556 = vmatmul.f32.gmra.mxu0 %v460
  %v557 = vpop.f32.mrf.mxu0
  %v558 = vadd.f32 0.0, %v557
  %559 = vdwg.mxu0
  %560 = vmatpush.msra.mxu0 %v537
  %561 = vmatpush.msra.mxu0 %v533
  %562 = vmatpush.msra.mxu0 %v529
  %563 = vmatpush.msra.mxu0 %v525
  %564 = vmatpush.msra.mxu0 %v521
  %565 = vmatpush.msra.mxu0 %v517
  %566 = vmatpush.msra.mxu0 %v513
  %567 = vmatpush.msra.mxu0 %v509
  %568 = vmatpush.msra.mxu0 %v505
  %569 = vmatpush.msra.mxu0 %v501
  %570 = vmatpush.msra.mxu0 %v497
  %571 = vmatpush.msra.mxu0 %v493
  %572 = vmatpush.msra.mxu0 %v489
  %573 = vmatpush.msra.mxu0 %v485
  %574 = vmatpush.msra.mxu0 %v481
  %575 = vmatpush.msra.mxu0 %v477
  %576 = vmatmul.f32.gmra.mxu0 %v460
  %v577 = vpop.f32.mrf.mxu0
  %v578 = vadd.f32 0.0, %v577
  %579 = vdwg.mxu0
  %580 = vmatpush.msra.mxu0 %v538
  %581 = vmatpush.msra.mxu0 %v534
  %582 = vmatpush.msra.mxu0 %v530
  %583 = vmatpush.msra.mxu0 %v526
  %584 = vmatpush.msra.mxu0 %v522
  %585 = vmatpush.msra.mxu0 %v518
  %586 = vmatpush.msra.mxu0 %v514
  %587 = vmatpush.msra.mxu0 %v510
  %588 = vmatpush.msra.mxu0 %v506
  %589 = vmatpush.msra.mxu0 %v502
  %590 = vmatpush.msra.mxu0 %v498
  %591 = vmatpush.msra.mxu0 %v494
  %592 = vmatpush.msra.mxu0 %v490
  %593 = vmatpush.msra.mxu0 %v486
  %594 = vmatpush.msra.mxu0 %v482
  %595 = vmatpush.msra.mxu0 %v478
  %596 = vmatmul.f32.gmra.mxu0 %v460
  %v597 = vpop.f32.mrf.mxu0
  %v598 = vadd.f32 0.0, %v597
  %599 = vdwg.mxu0
  %600 = vmatpush.msra.mxu0 %v539
  %601 = vmatpush.msra.mxu0 %v535
  %602 = vmatpush.msra.mxu0 %v531
  %603 = vmatpush.msra.mxu0 %v527
  %604 = vmatpush.msra.mxu0 %v523
  %605 = vmatpush.msra.mxu0 %v519
  %606 = vmatpush.msra.mxu0 %v515
  %607 = vmatpush.msra.mxu0 %v511
  %608 = vmatpush.msra.mxu0 %v507
  %609 = vmatpush.msra.mxu0 %v503
  %610 = vmatpush.msra.mxu0 %v499
  %611 = vmatpush.msra.mxu0 %v495
  %612 = vmatpush.msra.mxu0 %v491
  %613 = vmatpush.msra.mxu0 %v487
  %614 = vmatpush.msra.mxu0 %v483
  %615 = vmatpush.msra.mxu0 %v479
  %616 = vmatmul.f32.gmra.mxu0 %v460
  %v617 = vpop.f32.mrf.mxu0
  %v618 = vadd.f32 0.0, %v617
  %619 = vdwg.mxu0
  %v620 = vadd.f32 %v472, %v558
  %v621 = vadd.f32 %v473, %v578
  %v622 = vadd.f32 %v474, %v598
  %v623 = vadd.f32 %v475, %v618
  %v624 = vxor.u32 %v620, 2147483648
  %v625 = vmul.f32 %v624, 1.442695
  %v626 = vpow.pop %v625
  %v627 = vadd.f32 %v626, 1.0
  %v628 = vrcp.pop %v627
  %v629 = vmul.f32 %v627, %v628
  %v630 = vsub.f32 1.0, %v629
  %v631 = vmul.f32 %v628, %v630
  %v632 = vadd.f32 %v628, %v631
  %vm633 = vweird.f32 %v627
  %vm634 = vweird.f32 %v628
  %vm635 = vmor %vm633, %vm634
  %v636 = vsel %vm635, %v628, %v632
  %v637 = vand.u32 2147483647, %v627
  %vm638 = vcmp.eq.f32.partialorder %v637, 8.507059e+37
  %v639 = vand.u32 %v627, 2147483648
  %v640 = vor.u32 1.1754944e-38, %v639
  %v641 = vsel %vm638, %v640, %v636
  %v642 = vmul.f32 1.0, %v641
  %v643 = vxor.u32 %v621, 2147483648
  %v644 = vmul.f32 %v643, 1.442695
  %v645 = vpow.pop %v644
  %v646 = vadd.f32 %v645, 1.0
  %v647 = vrcp.pop %v646
  %v648 = vmul.f32 %v646, %v647
  %v649 = vsub.f32 1.0, %v648
  %v650 = vmul.f32 %v647, %v649
  %v651 = vadd.f32 %v647, %v650
  %vm652 = vweird.f32 %v646
  %vm653 = vweird.f32 %v647
  %vm654 = vmor %vm652, %vm653
  %v655 = vsel %vm654, %v647, %v651
  %v656 = vand.u32 2147483647, %v646
  %vm657 = vcmp.eq.f32.partialorder %v656, 8.507059e+37
  %v658 = vand.u32 %v646, 2147483648
  %v659 = vor.u32 1.1754944e-38, %v658
  %v660 = vsel %vm657, %v659, %v655
  %v661 = vmul.f32 1.0, %v660
  %v662 = vtanh.pop %v622
  %v663 = vxor.u32 %v623, 2147483648
  %v664 = vmul.f32 %v663, 1.442695
  %v665 = vpow.pop %v664
  %v666 = vadd.f32 %v665, 1.0
  %v667 = vrcp.pop %v666
  %v668 = vmul.f32 %v666, %v667
  %v669 = vsub.f32 1.0, %v668
  %v670 = vmul.f32 %v667, %v669
  %v671 = vadd.f32 %v667, %v670
  %vm672 = vweird.f32 %v666
  %vm673 = vweird.f32 %v667
  %vm674 = vmor %vm672, %vm673
  %v675 = vsel %vm674, %v667, %v671
  %v676 = vand.u32 2147483647, %v666
  %vm677 = vcmp.eq.f32.partialorder %v676, 8.507059e+37
  %v678 = vand.u32 %v666, 2147483648
  %v679 = vor.u32 1.1754944e-38, %v678
  %v680 = vsel %vm677, %v679, %v675
  %v681 = vmul.f32 1.0, %v680
  %v682 = vmul.f32 %v661, %v458
  %v683 = vmul.f32 %v642, %v662
  %v684 = vadd.f32 %v682, %v683
  %v685 = vtanh.pop %v684
  %v686 = vmul.f32 %v681, %v685
  %s687 = scalar_lea.vmem %s0, 16
  %v688 = vld [vmem:[%s687] sm:$0xff]
  %690 = vset.pattern.permute.xlu0 0
  %691 = vperm.xlu0 %690, %v688
  %v692 = vpop.permute.xlu0 %691
  %v694 = vmul.f32 %v686, %v692
  %s695 = scalar_lea.vmem %s3, 16
  %696 = vst [vmem:[%s695] sm:$0xff] %v694
  %s697 = scalar_lea.vmem %s1, 96
  %v698 = vld [vmem:[%s697] sm:$0xff]
  %v699 = vld [vmem:[%s697 + $0x8] sm:$0xff]
  %v700 = vld [vmem:[%s697 + $0x10] sm:$0xff]
  %v701 = vld [vmem:[%s697 + $0x18] sm:$0xff]
  %v702 = vld [vmem:[%s2] sm:$0xff]
  %v703 = vld [vmem:[%s2 + $0x8] sm:$0xff]
  %v704 = vld [vmem:[%s2 + $0x10] sm:$0xff]
  %v705 = vld [vmem:[%s2 + $0x18] sm:$0xff]
  %v706 = vld [vmem:[%s2 + $0x20] sm:$0xff]
  %v707 = vld [vmem:[%s2 + $0x28] sm:$0xff]
  %v708 = vld [vmem:[%s2 + $0x30] sm:$0xff]
  %v709 = vld [vmem:[%s2 + $0x38] sm:$0xff]
  %v710 = vld [vmem:[%s2 + $0x40] sm:$0xff]
  %v711 = vld [vmem:[%s2 + $0x48] sm:$0xff]
  %v712 = vld [vmem:[%s2 + $0x50] sm:$0xff]
  %v713 = vld [vmem:[%s2 + $0x58] sm:$0xff]
  %v714 = vld [vmem:[%s2 + $0x60] sm:$0xff]
  %v715 = vld [vmem:[%s2 + $0x68] sm:$0xff]
  %v716 = vld [vmem:[%s2 + $0x70] sm:$0xff]
  %v717 = vld [vmem:[%s2 + $0x78] sm:$0xff]
  %v718 = vld [vmem:[%s2 + $0x80] sm:$0xff]
  %v719 = vld [vmem:[%s2 + $0x88] sm:$0xff]
  %v720 = vld [vmem:[%s2 + $0x90] sm:$0xff]
  %v721 = vld [vmem:[%s2 + $0x98] sm:$0xff]
  %v722 = vld [vmem:[%s2 + $0xa0] sm:$0xff]
  %v723 = vld [vmem:[%s2 + $0xa8] sm:$0xff]
  %v724 = vld [vmem:[%s2 + $0xb0] sm:$0xff]
  %v725 = vld [vmem:[%s2 + $0xb8] sm:$0xff]
  %v726 = vld [vmem:[%s2 + $0xc0] sm:$0xff]
  %v727 = vld [vmem:[%s2 + $0xc8] sm:$0xff]
  %v728 = vld [vmem:[%s2 + $0xd0] sm:$0xff]
  %v729 = vld [vmem:[%s2 + $0xd8] sm:$0xff]
  %v730 = vld [vmem:[%s2 + $0xe0] sm:$0xff]
  %v731 = vld [vmem:[%s2 + $0xe8] sm:$0xff]
  %v732 = vld [vmem:[%s2 + $0xf0] sm:$0xff]
  %v733 = vld [vmem:[%s2 + $0xf8] sm:$0xff]
  %v734 = vld [vmem:[%s2 + $0x100] sm:$0xff]
  %v735 = vld [vmem:[%s2 + $0x108] sm:$0xff]
  %v736 = vld [vmem:[%s2 + $0x110] sm:$0xff]
  %v737 = vld [vmem:[%s2 + $0x118] sm:$0xff]
  %v738 = vld [vmem:[%s2 + $0x120] sm:$0xff]
  %v739 = vld [vmem:[%s2 + $0x128] sm:$0xff]
  %v740 = vld [vmem:[%s2 + $0x130] sm:$0xff]
  %v741 = vld [vmem:[%s2 + $0x138] sm:$0xff]
  %v742 = vld [vmem:[%s2 + $0x140] sm:$0xff]
  %v743 = vld [vmem:[%s2 + $0x148] sm:$0xff]
  %v744 = vld [vmem:[%s2 + $0x150] sm:$0xff]
  %v745 = vld [vmem:[%s2 + $0x158] sm:$0xff]
  %v746 = vld [vmem:[%s2 + $0x160] sm:$0xff]
  %v747 = vld [vmem:[%s2 + $0x168] sm:$0xff]
  %v748 = vld [vmem:[%s2 + $0x170] sm:$0xff]
  %v749 = vld [vmem:[%s2 + $0x178] sm:$0xff]
  %v750 = vld [vmem:[%s2 + $0x180] sm:$0xff]
  %v751 = vld [vmem:[%s2 + $0x188] sm:$0xff]
  %v752 = vld [vmem:[%s2 + $0x190] sm:$0xff]
  %v753 = vld [vmem:[%s2 + $0x198] sm:$0xff]
  %v754 = vld [vmem:[%s2 + $0x1a0] sm:$0xff]
  %v755 = vld [vmem:[%s2 + $0x1a8] sm:$0xff]
  %v756 = vld [vmem:[%s2 + $0x1b0] sm:$0xff]
  %v757 = vld [vmem:[%s2 + $0x1b8] sm:$0xff]
  %v758 = vld [vmem:[%s2 + $0x1c0] sm:$0xff]
  %v759 = vld [vmem:[%s2 + $0x1c8] sm:$0xff]
  %v760 = vld [vmem:[%s2 + $0x1d0] sm:$0xff]
  %v761 = vld [vmem:[%s2 + $0x1d8] sm:$0xff]
  %v762 = vld [vmem:[%s2 + $0x1e0] sm:$0xff]
  %v763 = vld [vmem:[%s2 + $0x1e8] sm:$0xff]
  %v764 = vld [vmem:[%s2 + $0x1f0] sm:$0xff]
  %v765 = vld [vmem:[%s2 + $0x1f8] sm:$0xff]
  %766 = vmatpush.msra.mxu0 %v762
  %767 = vmatpush.msra.mxu0 %v758
  %768 = vmatpush.msra.mxu0 %v754
  %769 = vmatpush.msra.mxu0 %v750
  %770 = vmatpush.msra.mxu0 %v746
  %771 = vmatpush.msra.mxu0 %v742
  %772 = vmatpush.msra.mxu0 %v738
  %773 = vmatpush.msra.mxu0 %v734
  %774 = vmatpush.msra.mxu0 %v730
  %775 = vmatpush.msra.mxu0 %v726
  %776 = vmatpush.msra.mxu0 %v722
  %777 = vmatpush.msra.mxu0 %v718
  %778 = vmatpush.msra.mxu0 %v714
  %779 = vmatpush.msra.mxu0 %v710
  %780 = vmatpush.msra.mxu0 %v706
  %781 = vmatpush.msra.mxu0 %v702
  %782 = vmatmul.f32.gmra.mxu0 %v686
  %v783 = vpop.f32.mrf.mxu0
  %v784 = vadd.f32 0.0, %v783
  %785 = vdwg.mxu0
  %786 = vmatpush.msra.mxu0 %v763
  %787 = vmatpush.msra.mxu0 %v759
  %788 = vmatpush.msra.mxu0 %v755
  %789 = vmatpush.msra.mxu0 %v751
  %790 = vmatpush.msra.mxu0 %v747
  %791 = vmatpush.msra.mxu0 %v743
  %792 = vmatpush.msra.mxu0 %v739
  %793 = vmatpush.msra.mxu0 %v735
  %794 = vmatpush.msra.mxu0 %v731
  %795 = vmatpush.msra.mxu0 %v727
  %796 = vmatpush.msra.mxu0 %v723
  %797 = vmatpush.msra.mxu0 %v719
  %798 = vmatpush.msra.mxu0 %v715
  %799 = vmatpush.msra.mxu0 %v711
  %800 = vmatpush.msra.mxu0 %v707
  %801 = vmatpush.msra.mxu0 %v703
  %802 = vmatmul.f32.gmra.mxu0 %v686
  %v803 = vpop.f32.mrf.mxu0
  %v804 = vadd.f32 0.0, %v803
  %805 = vdwg.mxu0
  %806 = vmatpush.msra.mxu0 %v764
  %807 = vmatpush.msra.mxu0 %v760
  %808 = vmatpush.msra.mxu0 %v756
  %809 = vmatpush.msra.mxu0 %v752
  %810 = vmatpush.msra.mxu0 %v748
  %811 = vmatpush.msra.mxu0 %v744
  %812 = vmatpush.msra.mxu0 %v740
  %813 = vmatpush.msra.mxu0 %v736
  %814 = vmatpush.msra.mxu0 %v732
  %815 = vmatpush.msra.mxu0 %v728
  %816 = vmatpush.msra.mxu0 %v724
  %817 = vmatpush.msra.mxu0 %v720
  %818 = vmatpush.msra.mxu0 %v716
  %819 = vmatpush.msra.mxu0 %v712
  %820 = vmatpush.msra.mxu0 %v708
  %821 = vmatpush.msra.mxu0 %v704
  %822 = vmatmul.f32.gmra.mxu0 %v686
  %v823 = vpop.f32.mrf.mxu0
  %v824 = vadd.f32 0.0, %v823
  %825 = vdwg.mxu0
  %826 = vmatpush.msra.mxu0 %v765
  %827 = vmatpush.msra.mxu0 %v761
  %828 = vmatpush.msra.mxu0 %v757
  %829 = vmatpush.msra.mxu0 %v753
  %830 = vmatpush.msra.mxu0 %v749
  %831 = vmatpush.msra.mxu0 %v745
  %832 = vmatpush.msra.mxu0 %v741
  %833 = vmatpush.msra.mxu0 %v737
  %834 = vmatpush.msra.mxu0 %v733
  %835 = vmatpush.msra.mxu0 %v729
  %836 = vmatpush.msra.mxu0 %v725
  %837 = vmatpush.msra.mxu0 %v721
  %838 = vmatpush.msra.mxu0 %v717
  %839 = vmatpush.msra.mxu0 %v713
  %840 = vmatpush.msra.mxu0 %v709
  %841 = vmatpush.msra.mxu0 %v705
  %842 = vmatmul.f32.gmra.mxu0 %v686
  %v843 = vpop.f32.mrf.mxu0
  %v844 = vadd.f32 0.0, %v843
  %845 = vdwg.mxu0
  %v846 = vadd.f32 %v698, %v784
  %v847 = vadd.f32 %v699, %v804
  %v848 = vadd.f32 %v700, %v824
  %v849 = vadd.f32 %v701, %v844
  %v850 = vxor.u32 %v846, 2147483648
  %v851 = vmul.f32 %v850, 1.442695
  %v852 = vpow.pop %v851
  %v853 = vadd.f32 %v852, 1.0
  %v854 = vrcp.pop %v853
  %v855 = vmul.f32 %v853, %v854
  %v856 = vsub.f32 1.0, %v855
  %v857 = vmul.f32 %v854, %v856
  %v858 = vadd.f32 %v854, %v857
  %vm859 = vweird.f32 %v853
  %vm860 = vweird.f32 %v854
  %vm861 = vmor %vm859, %vm860
  %v862 = vsel %vm861, %v854, %v858
  %v863 = vand.u32 2147483647, %v853
  %vm864 = vcmp.eq.f32.partialorder %v863, 8.507059e+37
  %v865 = vand.u32 %v853, 2147483648
  %v866 = vor.u32 1.1754944e-38, %v865
  %v867 = vsel %vm864, %v866, %v862
  %v868 = vmul.f32 1.0, %v867
  %v869 = vxor.u32 %v847, 2147483648
  %v870 = vmul.f32 %v869, 1.442695
  %v871 = vpow.pop %v870
  %v872 = vadd.f32 %v871, 1.0
  %v873 = vrcp.pop %v872
  %v874 = vmul.f32 %v872, %v873
  %v875 = vsub.f32 1.0, %v874
  %v876 = vmul.f32 %v873, %v875
  %v877 = vadd.f32 %v873, %v876
  %vm878 = vweird.f32 %v872
  %vm879 = vweird.f32 %v873
  %vm880 = vmor %vm878, %vm879
  %v881 = vsel %vm880, %v873, %v877
  %v882 = vand.u32 2147483647, %v872
  %vm883 = vcmp.eq.f32.partialorder %v882, 8.507059e+37
  %v884 = vand.u32 %v872, 2147483648
  %v885 = vor.u32 1.1754944e-38, %v884
  %v886 = vsel %vm883, %v885, %v881
  %v887 = vmul.f32 1.0, %v886
  %v888 = vtanh.pop %v848
  %v889 = vxor.u32 %v849, 2147483648
  %v890 = vmul.f32 %v889, 1.442695
  %v891 = vpow.pop %v890
  %v892 = vadd.f32 %v891, 1.0
  %v893 = vrcp.pop %v892
  %v894 = vmul.f32 %v892, %v893
  %v895 = vsub.f32 1.0, %v894
  %v896 = vmul.f32 %v893, %v895
  %v897 = vadd.f32 %v893, %v896
  %vm898 = vweird.f32 %v892
  %vm899 = vweird.f32 %v893
  %vm900 = vmor %vm898, %vm899
  %v901 = vsel %vm900, %v893, %v897
  %v902 = vand.u32 2147483647, %v892
  %vm903 = vcmp.eq.f32.partialorder %v902, 8.507059e+37
  %v904 = vand.u32 %v892, 2147483648
  %v905 = vor.u32 1.1754944e-38, %v904
  %v906 = vsel %vm903, %v905, %v901
  %v907 = vmul.f32 1.0, %v906
  %v908 = vmul.f32 %v887, %v684
  %v909 = vmul.f32 %v868, %v888
  %v910 = vadd.f32 %v908, %v909
  %v911 = vtanh.pop %v910
  %v912 = vmul.f32 %v907, %v911
  %s913 = scalar_lea.vmem %s0, 24
  %v914 = vld [vmem:[%s913] sm:$0xff]
  %916 = vset.pattern.permute.xlu0 0
  %917 = vperm.xlu0 %916, %v914
  %v918 = vpop.permute.xlu0 %917
  %v920 = vmul.f32 %v912, %v918
  %s921 = scalar_lea.vmem %s3, 24
  %922 = vst [vmem:[%s921] sm:$0xff] %v920
  %s923 = scalar_lea.vmem %s1, 128
  %v924 = vld [vmem:[%s923] sm:$0xff]
  %v925 = vld [vmem:[%s923 + $0x8] sm:$0xff]
  %v926 = vld [vmem:[%s923 + $0x10] sm:$0xff]
  %v927 = vld [vmem:[%s923 + $0x18] sm:$0xff]
  %v928 = vld [vmem:[%s2] sm:$0xff]
  %v929 = vld [vmem:[%s2 + $0x8] sm:$0xff]
  %v930 = vld [vmem:[%s2 + $0x10] sm:$0xff]
  %v931 = vld [vmem:[%s2 + $0x18] sm:$0xff]
  %v932 = vld [vmem:[%s2 + $0x20] sm:$0xff]
  %v933 = vld [vmem:[%s2 + $0x28] sm:$0xff]
  %v934 = vld [vmem:[%s2 + $0x30] sm:$0xff]
  %v935 = vld [vmem:[%s2 + $0x38] sm:$0xff]
  %v936 = vld [vmem:[%s2 + $0x40] sm:$0xff]
  %v937 = vld [vmem:[%s2 + $0x48] sm:$0xff]
  %v938 = vld [vmem:[%s2 + $0x50] sm:$0xff]
  %v939 = vld [vmem:[%s2 + $0x58] sm:$0xff]
  %v940 = vld [vmem:[%s2 + $0x60] sm:$0xff]
  %v941 = vld [vmem:[%s2 + $0x68] sm:$0xff]
  %v942 = vld [vmem:[%s2 + $0x70] sm:$0xff]
  %v943 = vld [vmem:[%s2 + $0x78] sm:$0xff]
  %v944 = vld [vmem:[%s2 + $0x80] sm:$0xff]
  %v945 = vld [vmem:[%s2 + $0x88] sm:$0xff]
  %v946 = vld [vmem:[%s2 + $0x90] sm:$0xff]
  %v947 = vld [vmem:[%s2 + $0x98] sm:$0xff]
  %v948 = vld [vmem:[%s2 + $0xa0] sm:$0xff]
  %v949 = vld [vmem:[%s2 + $0xa8] sm:$0xff]
  %v950 = vld [vmem:[%s2 + $0xb0] sm:$0xff]
  %v951 = vld [vmem:[%s2 + $0xb8] sm:$0xff]
  %v952 = vld [vmem:[%s2 + $0xc0] sm:$0xff]
  %v953 = vld [vmem:[%s2 + $0xc8] sm:$0xff]
  %v954 = vld [vmem:[%s2 + $0xd0] sm:$0xff]
  %v955 = vld [vmem:[%s2 + $0xd8] sm:$0xff]
  %v956 = vld [vmem:[%s2 + $0xe0] sm:$0xff]
  %v957 = vld [vmem:[%s2 + $0xe8] sm:$0xff]
  %v958 = vld [vmem:[%s2 + $0xf0] sm:$0xff]
  %v959 = vld [vmem:[%s2 + $0xf8] sm:$0xff]
  %v960 = vld [vmem:[%s2 + $0x100] sm:$0xff]
  %v961 = vld [vmem:[%s2 + $0x108] sm:$0xff]
  %v962 = vld [vmem:[%s2 + $0x110] sm:$0xff]
  %v963 = vld [vmem:[%s2 + $0x118] sm:$0xff]
  %v964 = vld [vmem:[%s2 + $0x120] sm:$0xff]
  %v965 = vld [vmem:[%s2 + $0x128] sm:$0xff]
  %v966 = vld [vmem:[%s2 + $0x130] sm:$0xff]
  %v967 = vld [vmem:[%s2 + $0x138] sm:$0xff]
  %v968 = vld [vmem:[%s2 + $0x140] sm:$0xff]
  %v969 = vld [vmem:[%s2 + $0x148] sm:$0xff]
  %v970 = vld [vmem:[%s2 + $0x150] sm:$0xff]
  %v971 = vld [vmem:[%s2 + $0x158] sm:$0xff]
  %v972 = vld [vmem:[%s2 + $0x160] sm:$0xff]
  %v973 = vld [vmem:[%s2 + $0x168] sm:$0xff]
  %v974 = vld [vmem:[%s2 + $0x170] sm:$0xff]
  %v975 = vld [vmem:[%s2 + $0x178] sm:$0xff]
  %v976 = vld [vmem:[%s2 + $0x180] sm:$0xff]
  %v977 = vld [vmem:[%s2 + $0x188] sm:$0xff]
  %v978 = vld [vmem:[%s2 + $0x190] sm:$0xff]
  %v979 = vld [vmem:[%s2 + $0x198] sm:$0xff]
  %v980 = vld [vmem:[%s2 + $0x1a0] sm:$0xff]
  %v981 = vld [vmem:[%s2 + $0x1a8] sm:$0xff]
  %v982 = vld [vmem:[%s2 + $0x1b0] sm:$0xff]
  %v983 = vld [vmem:[%s2 + $0x1b8] sm:$0xff]
  %v984 = vld [vmem:[%s2 + $0x1c0] sm:$0xff]
  %v985 = vld [vmem:[%s2 + $0x1c8] sm:$0xff]
  %v986 = vld [vmem:[%s2 + $0x1d0] sm:$0xff]
  %v987 = vld [vmem:[%s2 + $0x1d8] sm:$0xff]
  %v988 = vld [vmem:[%s2 + $0x1e0] sm:$0xff]
  %v989 = vld [vmem:[%s2 + $0x1e8] sm:$0xff]
  %v990 = vld [vmem:[%s2 + $0x1f0] sm:$0xff]
  %v991 = vld [vmem:[%s2 + $0x1f8] sm:$0xff]
  %992 = vmatpush.msra.mxu0 %v988
  %993 = vmatpush.msra.mxu0 %v984
  %994 = vmatpush.msra.mxu0 %v980
  %995 = vmatpush.msra.mxu0 %v976
  %996 = vmatpush.msra.mxu0 %v972
  %997 = vmatpush.msra.mxu0 %v968
  %998 = vmatpush.msra.mxu0 %v964
  %999 = vmatpush.msra.mxu0 %v960
  %1000 = vmatpush.msra.mxu0 %v956
  %1001 = vmatpush.msra.mxu0 %v952
  %1002 = vmatpush.msra.mxu0 %v948
  %1003 = vmatpush.msra.mxu0 %v944
  %1004 = vmatpush.msra.mxu0 %v940
  %1005 = vmatpush.msra.mxu0 %v936
  %1006 = vmatpush.msra.mxu0 %v932
  %1007 = vmatpush.msra.mxu0 %v928
  %1008 = vmatmul.f32.gmra.mxu0 %v912
  %v1009 = vpop.f32.mrf.mxu0
  %v1010 = vadd.f32 0.0, %v1009
  %1011 = vdwg.mxu0
  %1012 = vmatpush.msra.mxu0 %v989
  %1013 = vmatpush.msra.mxu0 %v985
  %1014 = vmatpush.msra.mxu0 %v981
  %1015 = vmatpush.msra.mxu0 %v977
  %1016 = vmatpush.msra.mxu0 %v973
  %1017 = vmatpush.msra.mxu0 %v969
  %1018 = vmatpush.msra.mxu0 %v965
  %1019 = vmatpush.msra.mxu0 %v961
  %1020 = vmatpush.msra.mxu0 %v957
  %1021 = vmatpush.msra.mxu0 %v953
  %1022 = vmatpush.msra.mxu0 %v949
  %1023 = vmatpush.msra.mxu0 %v945
  %1024 = vmatpush.msra.mxu0 %v941
  %1025 = vmatpush.msra.mxu0 %v937
  %1026 = vmatpush.msra.mxu0 %v933
  %1027 = vmatpush.msra.mxu0 %v929
  %1028 = vmatmul.f32.gmra.mxu0 %v912
  %v1029 = vpop.f32.mrf.mxu0
  %v1030 = vadd.f32 0.0, %v1029
  %1031 = vdwg.mxu0
  %1032 = vmatpush.msra.mxu0 %v990
  %1033 = vmatpush.msra.mxu0 %v986
  %1034 = vmatpush.msra.mxu0 %v982
  %1035 = vmatpush.msra.mxu0 %v978
  %1036 = vmatpush.msra.mxu0 %v974
  %1037 = vmatpush.msra.mxu0 %v970
  %1038 = vmatpush.msra.mxu0 %v966
  %1039 = vmatpush.msra.mxu0 %v962
  %1040 = vmatpush.msra.mxu0 %v958
  %1041 = vmatpush.msra.mxu0 %v954
  %1042 = vmatpush.msra.mxu0 %v950
  %1043 = vmatpush.msra.mxu0 %v946
  %1044 = vmatpush.msra.mxu0 %v942
  %1045 = vmatpush.msra.mxu0 %v938
  %1046 = vmatpush.msra.mxu0 %v934
  %1047 = vmatpush.msra.mxu0 %v930
  %1048 = vmatmul.f32.gmra.mxu0 %v912
  %v1049 = vpop.f32.mrf.mxu0
  %v1050 = vadd.f32 0.0, %v1049
  %1051 = vdwg.mxu0
  %1052 = vmatpush.msra.mxu0 %v991
  %1053 = vmatpush.msra.mxu0 %v987
  %1054 = vmatpush.msra.mxu0 %v983
  %1055 = vmatpush.msra.mxu0 %v979
  %1056 = vmatpush.msra.mxu0 %v975
  %1057 = vmatpush.msra.mxu0 %v971
  %1058 = vmatpush.msra.mxu0 %v967
  %1059 = vmatpush.msra.mxu0 %v963
  %1060 = vmatpush.msra.mxu0 %v959
  %1061 = vmatpush.msra.mxu0 %v955
  %1062 = vmatpush.msra.mxu0 %v951
  %1063 = vmatpush.msra.mxu0 %v947
  %1064 = vmatpush.msra.mxu0 %v943
  %1065 = vmatpush.msra.mxu0 %v939
  %1066 = vmatpush.msra.mxu0 %v935
  %1067 = vmatpush.msra.mxu0 %v931
  %1068 = vmatmul.f32.gmra.mxu0 %v912
  %v1069 = vpop.f32.mrf.mxu0
  %v1070 = vadd.f32 0.0, %v1069
  %1071 = vdwg.mxu0
  %v1072 = vadd.f32 %v924, %v1010
  %v1073 = vadd.f32 %v925, %v1030
  %v1074 = vadd.f32 %v926, %v1050
  %v1075 = vadd.f32 %v927, %v1070
  %v1076 = vxor.u32 %v1072, 2147483648
  %v1077 = vmul.f32 %v1076, 1.442695
  %v1078 = vpow.pop %v1077
  %v1079 = vadd.f32 %v1078, 1.0
  %v1080 = vrcp.pop %v1079
  %v1081 = vmul.f32 %v1079, %v1080
  %v1082 = vsub.f32 1.0, %v1081
  %v1083 = vmul.f32 %v1080, %v1082
  %v1084 = vadd.f32 %v1080, %v1083
  %vm1085 = vweird.f32 %v1079
  %vm1086 = vweird.f32 %v1080
  %vm1087 = vmor %vm1085, %vm1086
  %v1088 = vsel %vm1087, %v1080, %v1084
  %v1089 = vand.u32 2147483647, %v1079
  %vm1090 = vcmp.eq.f32.partialorder %v1089, 8.507059e+37
  %v1091 = vand.u32 %v1079, 2147483648
  %v1092 = vor.u32 1.1754944e-38, %v1091
  %v1093 = vsel %vm1090, %v1092, %v1088
  %v1094 = vmul.f32 1.0, %v1093
  %v1095 = vxor.u32 %v1073, 2147483648
  %v1096 = vmul.f32 %v1095, 1.442695
  %v1097 = vpow.pop %v1096
  %v1098 = vadd.f32 %v1097, 1.0
  %v1099 = vrcp.pop %v1098
  %v1100 = vmul.f32 %v1098, %v1099
  %v1101 = vsub.f32 1.0, %v1100
  %v1102 = vmul.f32 %v1099, %v1101
  %v1103 = vadd.f32 %v1099, %v1102
  %vm1104 = vweird.f32 %v1098
  %vm1105 = vweird.f32 %v1099
  %vm1106 = vmor %vm1104, %vm1105
  %v1107 = vsel %vm1106, %v1099, %v1103
  %v1108 = vand.u32 2147483647, %v1098
  %vm1109 = vcmp.eq.f32.partialorder %v1108, 8.507059e+37
  %v1110 = vand.u32 %v1098, 2147483648
  %v1111 = vor.u32 1.1754944e-38, %v1110
  %v1112 = vsel %vm1109, %v1111, %v1107
  %v1113 = vmul.f32 1.0, %v1112
  %v1114 = vtanh.pop %v1074
  %v1115 = vxor.u32 %v1075, 2147483648
  %v1116 = vmul.f32 %v1115, 1.442695
  %v1117 = vpow.pop %v1116
  %v1118 = vadd.f32 %v1117, 1.0
  %v1119 = vrcp.pop %v1118
  %v1120 = vmul.f32 %v1118, %v1119
  %v1121 = vsub.f32 1.0, %v1120
  %v1122 = vmul.f32 %v1119, %v1121
  %v1123 = vadd.f32 %v1119, %v1122
  %vm1124 = vweird.f32 %v1118
  %vm1125 = vweird.f32 %v1119
  %vm1126 = vmor %vm1124, %vm1125
  %v1127 = vsel %vm1126, %v1119, %v1123
  %v1128 = vand.u32 2147483647, %v1118
  %vm1129 = vcmp.eq.f32.partialorder %v1128, 8.507059e+37
  %v1130 = vand.u32 %v1118, 2147483648
  %v1131 = vor.u32 1.1754944e-38, %v1130
  %v1132 = vsel %vm1129, %v1131, %v1127
  %v1133 = vmul.f32 1.0, %v1132
  %v1134 = vmul.f32 %v1113, %v910
  %v1135 = vmul.f32 %v1094, %v1114
  %v1136 = vadd.f32 %v1134, %v1135
  %v1137 = vtanh.pop %v1136
  %v1138 = vmul.f32 %v1133, %v1137
  %s1139 = scalar_lea.vmem %s0, 32
  %v1140 = vld [vmem:[%s1139] sm:$0xff]
  %1142 = vset.pattern.permute.xlu0 0
  %1143 = vperm.xlu0 %1142, %v1140
  %v1144 = vpop.permute.xlu0 %1143
  %v1146 = vmul.f32 %v1138, %v1144
  %s1147 = scalar_lea.vmem %s3, 32
  %1148 = vst [vmem:[%s1147] sm:$0xff] %v1146
  %s1149 = scalar_lea.vmem %s1, 160
  %v1150 = vld [vmem:[%s1149] sm:$0xff]
  %v1151 = vld [vmem:[%s1149 + $0x8] sm:$0xff]
  %v1152 = vld [vmem:[%s1149 + $0x10] sm:$0xff]
  %v1153 = vld [vmem:[%s1149 + $0x18] sm:$0xff]
  %v1154 = vld [vmem:[%s2] sm:$0xff]
  %v1155 = vld [vmem:[%s2 + $0x8] sm:$0xff]
  %v1156 = vld [vmem:[%s2 + $0x10] sm:$0xff]
  %v1157 = vld [vmem:[%s2 + $0x18] sm:$0xff]
  %v1158 = vld [vmem:[%s2 + $0x20] sm:$0xff]
  %v1159 = vld [vmem:[%s2 + $0x28] sm:$0xff]
  %v1160 = vld [vmem:[%s2 + $0x30] sm:$0xff]
  %v1161 = vld [vmem:[%s2 + $0x38] sm:$0xff]
  %v1162 = vld [vmem:[%s2 + $0x40] sm:$0xff]
  %v1163 = vld [vmem:[%s2 + $0x48] sm:$0xff]
  %v1164 = vld [vmem:[%s2 + $0x50] sm:$0xff]
  %v1165 = vld [vmem:[%s2 + $0x58] sm:$0xff]
  %v1166 = vld [vmem:[%s2 + $0x60] sm:$0xff]
  %v1167 = vld [vmem:[%s2 + $0x68] sm:$0xff]
  %v1168 = vld [vmem:[%s2 + $0x70] sm:$0xff]
  %v1169 = vld [vmem:[%s2 + $0x78] sm:$0xff]
  %v1170 = vld [vmem:[%s2 + $0x80] sm:$0xff]
  %v1171 = vld [vmem:[%s2 + $0x88] sm:$0xff]
  %v1172 = vld [vmem:[%s2 + $0x90] sm:$0xff]
  %v1173 = vld [vmem:[%s2 + $0x98] sm:$0xff]
  %v1174 = vld [vmem:[%s2 + $0xa0] sm:$0xff]
  %v1175 = vld [vmem:[%s2 + $0xa8] sm:$0xff]
  %v1176 = vld [vmem:[%s2 + $0xb0] sm:$0xff]
  %v1177 = vld [vmem:[%s2 + $0xb8] sm:$0xff]
  %v1178 = vld [vmem:[%s2 + $0xc0] sm:$0xff]
  %v1179 = vld [vmem:[%s2 + $0xc8] sm:$0xff]
  %v1180 = vld [vmem:[%s2 + $0xd0] sm:$0xff]
  %v1181 = vld [vmem:[%s2 + $0xd8] sm:$0xff]
  %v1182 = vld [vmem:[%s2 + $0xe0] sm:$0xff]
  %v1183 = vld [vmem:[%s2 + $0xe8] sm:$0xff]
  %v1184 = vld [vmem:[%s2 + $0xf0] sm:$0xff]
  %v1185 = vld [vmem:[%s2 + $0xf8] sm:$0xff]
  %v1186 = vld [vmem:[%s2 + $0x100] sm:$0xff]
  %v1187 = vld [vmem:[%s2 + $0x108] sm:$0xff]
  %v1188 = vld [vmem:[%s2 + $0x110] sm:$0xff]
  %v1189 = vld [vmem:[%s2 + $0x118] sm:$0xff]
  %v1190 = vld [vmem:[%s2 + $0x120] sm:$0xff]
  %v1191 = vld [vmem:[%s2 + $0x128] sm:$0xff]
  %v1192 = vld [vmem:[%s2 + $0x130] sm:$0xff]
  %v1193 = vld [vmem:[%s2 + $0x138] sm:$0xff]
  %v1194 = vld [vmem:[%s2 + $0x140] sm:$0xff]
  %v1195 = vld [vmem:[%s2 + $0x148] sm:$0xff]
  %v1196 = vld [vmem:[%s2 + $0x150] sm:$0xff]
  %v1197 = vld [vmem:[%s2 + $0x158] sm:$0xff]
  %v1198 = vld [vmem:[%s2 + $0x160] sm:$0xff]
  %v1199 = vld [vmem:[%s2 + $0x168] sm:$0xff]
  %v1200 = vld [vmem:[%s2 + $0x170] sm:$0xff]
  %v1201 = vld [vmem:[%s2 + $0x178] sm:$0xff]
  %v1202 = vld [vmem:[%s2 + $0x180] sm:$0xff]
  %v1203 = vld [vmem:[%s2 + $0x188] sm:$0xff]
  %v1204 = vld [vmem:[%s2 + $0x190] sm:$0xff]
  %v1205 = vld [vmem:[%s2 + $0x198] sm:$0xff]
  %v1206 = vld [vmem:[%s2 + $0x1a0] sm:$0xff]
  %v1207 = vld [vmem:[%s2 + $0x1a8] sm:$0xff]
  %v1208 = vld [vmem:[%s2 + $0x1b0] sm:$0xff]
  %v1209 = vld [vmem:[%s2 + $0x1b8] sm:$0xff]
  %v1210 = vld [vmem:[%s2 + $0x1c0] sm:$0xff]
  %v1211 = vld [vmem:[%s2 + $0x1c8] sm:$0xff]
  %v1212 = vld [vmem:[%s2 + $0x1d0] sm:$0xff]
  %v1213 = vld [vmem:[%s2 + $0x1d8] sm:$0xff]
  %v1214 = vld [vmem:[%s2 + $0x1e0] sm:$0xff]
  %v1215 = vld [vmem:[%s2 + $0x1e8] sm:$0xff]
  %v1216 = vld [vmem:[%s2 + $0x1f0] sm:$0xff]
  %v1217 = vld [vmem:[%s2 + $0x1f8] sm:$0xff]
  %1218 = vmatpush.msra.mxu0 %v1214
  %1219 = vmatpush.msra.mxu0 %v1210
  %1220 = vmatpush.msra.mxu0 %v1206
  %1221 = vmatpush.msra.mxu0 %v1202
  %1222 = vmatpush.msra.mxu0 %v1198
  %1223 = vmatpush.msra.mxu0 %v1194
  %1224 = vmatpush.msra.mxu0 %v1190
  %1225 = vmatpush.msra.mxu0 %v1186
  %1226 = vmatpush.msra.mxu0 %v1182
  %1227 = vmatpush.msra.mxu0 %v1178
  %1228 = vmatpush.msra.mxu0 %v1174
  %1229 = vmatpush.msra.mxu0 %v1170
  %1230 = vmatpush.msra.mxu0 %v1166
  %1231 = vmatpush.msra.mxu0 %v1162
  %1232 = vmatpush.msra.mxu0 %v1158
  %1233 = vmatpush.msra.mxu0 %v1154
  %1234 = vmatmul.f32.gmra.mxu0 %v1138
  %v1235 = vpop.f32.mrf.mxu0
  %v1236 = vadd.f32 0.0, %v1235
  %1237 = vdwg.mxu0
  %1238 = vmatpush.msra.mxu0 %v1215
  %1239 = vmatpush.msra.mxu0 %v1211
  %1240 = vmatpush.msra.mxu0 %v1207
  %1241 = vmatpush.msra.mxu0 %v1203
  %1242 = vmatpush.msra.mxu0 %v1199
  %1243 = vmatpush.msra.mxu0 %v1195
  %1244 = vmatpush.msra.mxu0 %v1191
  %1245 = vmatpush.msra.mxu0 %v1187
  %1246 = vmatpush.msra.mxu0 %v1183
  %1247 = vmatpush.msra.mxu0 %v1179
  %1248 = vmatpush.msra.mxu0 %v1175
  %1249 = vmatpush.msra.mxu0 %v1171
  %1250 = vmatpush.msra.mxu0 %v1167
  %1251 = vmatpush.msra.mxu0 %v1163
  %1252 = vmatpush.msra.mxu0 %v1159
  %1253 = vmatpush.msra.mxu0 %v1155
  %1254 = vmatmul.f32.gmra.mxu0 %v1138
  %v1255 = vpop.f32.mrf.mxu0
  %v1256 = vadd.f32 0.0, %v1255
  %1257 = vdwg.mxu0
  %1258 = vmatpush.msra.mxu0 %v1216
  %1259 = vmatpush.msra.mxu0 %v1212
  %1260 = vmatpush.msra.mxu0 %v1208
  %1261 = vmatpush.msra.mxu0 %v1204
  %1262 = vmatpush.msra.mxu0 %v1200
  %1263 = vmatpush.msra.mxu0 %v1196
  %1264 = vmatpush.msra.mxu0 %v1192
  %1265 = vmatpush.msra.mxu0 %v1188
  %1266 = vmatpush.msra.mxu0 %v1184
  %1267 = vmatpush.msra.mxu0 %v1180
  %1268 = vmatpush.msra.mxu0 %v1176
  %1269 = vmatpush.msra.mxu0 %v1172
  %1270 = vmatpush.msra.mxu0 %v1168
  %1271 = vmatpush.msra.mxu0 %v1164
  %1272 = vmatpush.msra.mxu0 %v1160
  %1273 = vmatpush.msra.mxu0 %v1156
  %1274 = vmatmul.f32.gmra.mxu0 %v1138
  %v1275 = vpop.f32.mrf.mxu0
  %v1276 = vadd.f32 0.0, %v1275
  %1277 = vdwg.mxu0
  %1278 = vmatpush.msra.mxu0 %v1217
  %1279 = vmatpush.msra.mxu0 %v1213
  %1280 = vmatpush.msra.mxu0 %v1209
  %1281 = vmatpush.msra.mxu0 %v1205
  %1282 = vmatpush.msra.mxu0 %v1201
  %1283 = vmatpush.msra.mxu0 %v1197
  %1284 = vmatpush.msra.mxu0 %v1193
  %1285 = vmatpush.msra.mxu0 %v1189
  %1286 = vmatpush.msra.mxu0 %v1185
  %1287 = vmatpush.msra.mxu0 %v1181
  %1288 = vmatpush.msra.mxu0 %v1177
  %1289 = vmatpush.msra.mxu0 %v1173
  %1290 = vmatpush.msra.mxu0 %v1169
  %1291 = vmatpush.msra.mxu0 %v1165
  %1292 = vmatpush.msra.mxu0 %v1161
  %1293 = vmatpush.msra.mxu0 %v1157
  %1294 = vmatmul.f32.gmra.mxu0 %v1138
  %v1295 = vpop.f32.mrf.mxu0
  %v1296 = vadd.f32 0.0, %v1295
  %1297 = vdwg.mxu0
  %v1298 = vadd.f32 %v1150, %v1236
  %v1299 = vadd.f32 %v1151, %v1256
  %v1300 = vadd.f32 %v1152, %v1276
  %v1301 = vadd.f32 %v1153, %v1296
  %v1302 = vxor.u32 %v1298, 2147483648
  %v1303 = vmul.f32 %v1302, 1.442695
  %v1304 = vpow.pop %v1303
  %v1305 = vadd.f32 %v1304, 1.0
  %v1306 = vrcp.pop %v1305
  %v1307 = vmul.f32 %v1305, %v1306
  %v1308 = vsub.f32 1.0, %v1307
  %v1309 = vmul.f32 %v1306, %v1308
  %v1310 = vadd.f32 %v1306, %v1309
  %vm1311 = vweird.f32 %v1305
  %vm1312 = vweird.f32 %v1306
  %vm1313 = vmor %vm1311, %vm1312
  %v1314 = vsel %vm1313, %v1306, %v1310
  %v1315 = vand.u32 2147483647, %v1305
  %vm1316 = vcmp.eq.f32.partialorder %v1315, 8.507059e+37
  %v1317 = vand.u32 %v1305, 2147483648
  %v1318 = vor.u32 1.1754944e-38, %v1317
  %v1319 = vsel %vm1316, %v1318, %v1314
  %v1320 = vmul.f32 1.0, %v1319
  %v1321 = vxor.u32 %v1299, 2147483648
  %v1322 = vmul.f32 %v1321, 1.442695
  %v1323 = vpow.pop %v1322
  %v1324 = vadd.f32 %v1323, 1.0
  %v1325 = vrcp.pop %v1324
  %v1326 = vmul.f32 %v1324, %v1325
  %v1327 = vsub.f32 1.0, %v1326
  %v1328 = vmul.f32 %v1325, %v1327
  %v1329 = vadd.f32 %v1325, %v1328
  %vm1330 = vweird.f32 %v1324
  %vm1331 = vweird.f32 %v1325
  %vm1332 = vmor %vm1330, %vm1331
  %v1333 = vsel %vm1332, %v1325, %v1329
  %v1334 = vand.u32 2147483647, %v1324
  %vm1335 = vcmp.eq.f32.partialorder %v1334, 8.507059e+37
  %v1336 = vand.u32 %v1324, 2147483648
  %v1337 = vor.u32 1.1754944e-38, %v1336
  %v1338 = vsel %vm1335, %v1337, %v1333
  %v1339 = vmul.f32 1.0, %v1338
  %v1340 = vtanh.pop %v1300
  %v1341 = vxor.u32 %v1301, 2147483648
  %v1342 = vmul.f32 %v1341, 1.442695
  %v1343 = vpow.pop %v1342
  %v1344 = vadd.f32 %v1343, 1.0
  %v1345 = vrcp.pop %v1344
  %v1346 = vmul.f32 %v1344, %v1345
  %v1347 = vsub.f32 1.0, %v1346
  %v1348 = vmul.f32 %v1345, %v1347
  %v1349 = vadd.f32 %v1345, %v1348
  %vm1350 = vweird.f32 %v1344
  %vm1351 = vweird.f32 %v1345
  %vm1352 = vmor %vm1350, %vm1351
  %v1353 = vsel %vm1352, %v1345, %v1349
  %v1354 = vand.u32 2147483647, %v1344
  %vm1355 = vcmp.eq.f32.partialorder %v1354, 8.507059e+37
  %v1356 = vand.u32 %v1344, 2147483648
  %v1357 = vor.u32 1.1754944e-38, %v1356
  %v1358 = vsel %vm1355, %v1357, %v1353
  %v1359 = vmul.f32 1.0, %v1358
  %v1360 = vmul.f32 %v1339, %v1136
  %v1361 = vmul.f32 %v1320, %v1340
  %v1362 = vadd.f32 %v1360, %v1361
  %v1363 = vtanh.pop %v1362
  %v1364 = vmul.f32 %v1359, %v1363
  %s1365 = scalar_lea.vmem %s0, 40
  %v1366 = vld [vmem:[%s1365] sm:$0xff]
  %1368 = vset.pattern.permute.xlu0 0
  %1369 = vperm.xlu0 %1368, %v1366
  %v1370 = vpop.permute.xlu0 %1369
  %v1372 = vmul.f32 %v1364, %v1370
  %s1373 = scalar_lea.vmem %s3, 40
  %1374 = vst [vmem:[%s1373] sm:$0xff] %v1372
  %s1375 = scalar_lea.vmem %s1, 192
  %v1376 = vld [vmem:[%s1375] sm:$0xff]
  %v1377 = vld [vmem:[%s1375 + $0x8] sm:$0xff]
  %v1378 = vld [vmem:[%s1375 + $0x10] sm:$0xff]
  %v1379 = vld [vmem:[%s1375 + $0x18] sm:$0xff]
  %v1380 = vld [vmem:[%s2] sm:$0xff]
  %v1381 = vld [vmem:[%s2 + $0x8] sm:$0xff]
  %v1382 = vld [vmem:[%s2 + $0x10] sm:$0xff]
  %v1383 = vld [vmem:[%s2 + $0x18] sm:$0xff]
  %v1384 = vld [vmem:[%s2 + $0x20] sm:$0xff]
  %v1385 = vld [vmem:[%s2 + $0x28] sm:$0xff]
  %v1386 = vld [vmem:[%s2 + $0x30] sm:$0xff]
  %v1387 = vld [vmem:[%s2 + $0x38] sm:$0xff]
  %v1388 = vld [vmem:[%s2 + $0x40] sm:$0xff]
  %v1389 = vld [vmem:[%s2 + $0x48] sm:$0xff]
  %v1390 = vld [vmem:[%s2 + $0x50] sm:$0xff]
  %v1391 = vld [vmem:[%s2 + $0x58] sm:$0xff]
  %v1392 = vld [vmem:[%s2 + $0x60] sm:$0xff]
  %v1393 = vld [vmem:[%s2 + $0x68] sm:$0xff]
  %v1394 = vld [vmem:[%s2 + $0x70] sm:$0xff]
  %v1395 = vld [vmem:[%s2 + $0x78] sm:$0xff]
  %v1396 = vld [vmem:[%s2 + $0x80] sm:$0xff]
  %v1397 = vld [vmem:[%s2 + $0x88] sm:$0xff]
  %v1398 = vld [vmem:[%s2 + $0x90] sm:$0xff]
  %v1399 = vld [vmem:[%s2 + $0x98] sm:$0xff]
  %v1400 = vld [vmem:[%s2 + $0xa0] sm:$0xff]
  %v1401 = vld [vmem:[%s2 + $0xa8] sm:$0xff]
  %v1402 = vld [vmem:[%s2 + $0xb0] sm:$0xff]
  %v1403 = vld [vmem:[%s2 + $0xb8] sm:$0xff]
  %v1404 = vld [vmem:[%s2 + $0xc0] sm:$0xff]
  %v1405 = vld [vmem:[%s2 + $0xc8] sm:$0xff]
  %v1406 = vld [vmem:[%s2 + $0xd0] sm:$0xff]
  %v1407 = vld [vmem:[%s2 + $0xd8] sm:$0xff]
  %v1408 = vld [vmem:[%s2 + $0xe0] sm:$0xff]
  %v1409 = vld [vmem:[%s2 + $0xe8] sm:$0xff]
  %v1410 = vld [vmem:[%s2 + $0xf0] sm:$0xff]
  %v1411 = vld [vmem:[%s2 + $0xf8] sm:$0xff]
  %v1412 = vld [vmem:[%s2 + $0x100] sm:$0xff]
  %v1413 = vld [vmem:[%s2 + $0x108] sm:$0xff]
  %v1414 = vld [vmem:[%s2 + $0x110] sm:$0xff]
  %v1415 = vld [vmem:[%s2 + $0x118] sm:$0xff]
  %v1416 = vld [vmem:[%s2 + $0x120] sm:$0xff]
  %v1417 = vld [vmem:[%s2 + $0x128] sm:$0xff]
  %v1418 = vld [vmem:[%s2 + $0x130] sm:$0xff]
  %v1419 = vld [vmem:[%s2 + $0x138] sm:$0xff]
  %v1420 = vld [vmem:[%s2 + $0x140] sm:$0xff]
  %v1421 = vld [vmem:[%s2 + $0x148] sm:$0xff]
  %v1422 = vld [vmem:[%s2 + $0x150] sm:$0xff]
  %v1423 = vld [vmem:[%s2 + $0x158] sm:$0xff]
  %v1424 = vld [vmem:[%s2 + $0x160] sm:$0xff]
  %v1425 = vld [vmem:[%s2 + $0x168] sm:$0xff]
  %v1426 = vld [vmem:[%s2 + $0x170] sm:$0xff]
  %v1427 = vld [vmem:[%s2 + $0x178] sm:$0xff]
  %v1428 = vld [vmem:[%s2 + $0x180] sm:$0xff]
  %v1429 = vld [vmem:[%s2 + $0x188] sm:$0xff]
  %v1430 = vld [vmem:[%s2 + $0x190] sm:$0xff]
  %v1431 = vld [vmem:[%s2 + $0x198] sm:$0xff]
  %v1432 = vld [vmem:[%s2 + $0x1a0] sm:$0xff]
  %v1433 = vld [vmem:[%s2 + $0x1a8] sm:$0xff]
  %v1434 = vld [vmem:[%s2 + $0x1b0] sm:$0xff]
  %v1435 = vld [vmem:[%s2 + $0x1b8] sm:$0xff]
  %v1436 = vld [vmem:[%s2 + $0x1c0] sm:$0xff]
  %v1437 = vld [vmem:[%s2 + $0x1c8] sm:$0xff]
  %v1438 = vld [vmem:[%s2 + $0x1d0] sm:$0xff]
  %v1439 = vld [vmem:[%s2 + $0x1d8] sm:$0xff]
  %v1440 = vld [vmem:[%s2 + $0x1e0] sm:$0xff]
  %v1441 = vld [vmem:[%s2 + $0x1e8] sm:$0xff]
  %v1442 = vld [vmem:[%s2 + $0x1f0] sm:$0xff]
  %v1443 = vld [vmem:[%s2 + $0x1f8] sm:$0xff]
  %1444 = vmatpush.msra.mxu0 %v1440
  %1445 = vmatpush.msra.mxu0 %v1436
  %1446 = vmatpush.msra.mxu0 %v1432
  %1447 = vmatpush.msra.mxu0 %v1428
  %1448 = vmatpush.msra.mxu0 %v1424
  %1449 = vmatpush.msra.mxu0 %v1420
  %1450 = vmatpush.msra.mxu0 %v1416
  %1451 = vmatpush.msra.mxu0 %v1412
  %1452 = vmatpush.msra.mxu0 %v1408
  %1453 = vmatpush.msra.mxu0 %v1404
  %1454 = vmatpush.msra.mxu0 %v1400
  %1455 = vmatpush.msra.mxu0 %v1396
  %1456 = vmatpush.msra.mxu0 %v1392
  %1457 = vmatpush.msra.mxu0 %v1388
  %1458 = vmatpush.msra.mxu0 %v1384
  %1459 = vmatpush.msra.mxu0 %v1380
  %1460 = vmatmul.f32.gmra.mxu0 %v1364
  %v1461 = vpop.f32.mrf.mxu0
  %v1462 = vadd.f32 0.0, %v1461
  %1463 = vdwg.mxu0
  %1464 = vmatpush.msra.mxu0 %v1441
  %1465 = vmatpush.msra.mxu0 %v1437
  %1466 = vmatpush.msra.mxu0 %v1433
  %1467 = vmatpush.msra.mxu0 %v1429
  %1468 = vmatpush.msra.mxu0 %v1425
  %1469 = vmatpush.msra.mxu0 %v1421
  %1470 = vmatpush.msra.mxu0 %v1417
  %1471 = vmatpush.msra.mxu0 %v1413
  %1472 = vmatpush.msra.mxu0 %v1409
  %1473 = vmatpush.msra.mxu0 %v1405
  %1474 = vmatpush.msra.mxu0 %v1401
  %1475 = vmatpush.msra.mxu0 %v1397
  %1476 = vmatpush.msra.mxu0 %v1393
  %1477 = vmatpush.msra.mxu0 %v1389
  %1478 = vmatpush.msra.mxu0 %v1385
  %1479 = vmatpush.msra.mxu0 %v1381
  %1480 = vmatmul.f32.gmra.mxu0 %v1364
  %v1481 = vpop.f32.mrf.mxu0
  %v1482 = vadd.f32 0.0, %v1481
  %1483 = vdwg.mxu0
  %1484 = vmatpush.msra.mxu0 %v1442
  %1485 = vmatpush.msra.mxu0 %v1438
  %1486 = vmatpush.msra.mxu0 %v1434
  %1487 = vmatpush.msra.mxu0 %v1430
  %1488 = vmatpush.msra.mxu0 %v1426
  %1489 = vmatpush.msra.mxu0 %v1422
  %1490 = vmatpush.msra.mxu0 %v1418
  %1491 = vmatpush.msra.mxu0 %v1414
  %1492 = vmatpush.msra.mxu0 %v1410
  %1493 = vmatpush.msra.mxu0 %v1406
  %1494 = vmatpush.msra.mxu0 %v1402
  %1495 = vmatpush.msra.mxu0 %v1398
  %1496 = vmatpush.msra.mxu0 %v1394
  %1497 = vmatpush.msra.mxu0 %v1390
  %1498 = vmatpush.msra.mxu0 %v1386
  %1499 = vmatpush.msra.mxu0 %v1382
  %1500 = vmatmul.f32.gmra.mxu0 %v1364
  %v1501 = vpop.f32.mrf.mxu0
  %v1502 = vadd.f32 0.0, %v1501
  %1503 = vdwg.mxu0
  %1504 = vmatpush.msra.mxu0 %v1443
  %1505 = vmatpush.msra.mxu0 %v1439
  %1506 = vmatpush.msra.mxu0 %v1435
  %1507 = vmatpush.msra.mxu0 %v1431
  %1508 = vmatpush.msra.mxu0 %v1427
  %1509 = vmatpush.msra.mxu0 %v1423
  %1510 = vmatpush.msra.mxu0 %v1419
  %1511 = vmatpush.msra.mxu0 %v1415
  %1512 = vmatpush.msra.mxu0 %v1411
  %1513 = vmatpush.msra.mxu0 %v1407
  %1514 = vmatpush.msra.mxu0 %v1403
  %1515 = vmatpush.msra.mxu0 %v1399
  %1516 = vmatpush.msra.mxu0 %v1395
  %1517 = vmatpush.msra.mxu0 %v1391
  %1518 = vmatpush.msra.mxu0 %v1387
  %1519 = vmatpush.msra.mxu0 %v1383
  %1520 = vmatmul.f32.gmra.mxu0 %v1364
  %v1521 = vpop.f32.mrf.mxu0
  %v1522 = vadd.f32 0.0, %v1521
  %1523 = vdwg.mxu0
  %v1524 = vadd.f32 %v1376, %v1462
  %v1525 = vadd.f32 %v1377, %v1482
  %v1526 = vadd.f32 %v1378, %v1502
  %v1527 = vadd.f32 %v1379, %v1522
  %v1528 = vxor.u32 %v1524, 2147483648
  %v1529 = vmul.f32 %v1528, 1.442695
  %v1530 = vpow.pop %v1529
  %v1531 = vadd.f32 %v1530, 1.0
  %v1532 = vrcp.pop %v1531
  %v1533 = vmul.f32 %v1531, %v1532
  %v1534 = vsub.f32 1.0, %v1533
  %v1535 = vmul.f32 %v1532, %v1534
  %v1536 = vadd.f32 %v1532, %v1535
  %vm1537 = vweird.f32 %v1531
  %vm1538 = vweird.f32 %v1532
  %vm1539 = vmor %vm1537, %vm1538
  %v1540 = vsel %vm1539, %v1532, %v1536
  %v1541 = vand.u32 2147483647, %v1531
  %vm1542 = vcmp.eq.f32.partialorder %v1541, 8.507059e+37
  %v1543 = vand.u32 %v1531, 2147483648
  %v1544 = vor.u32 1.1754944e-38, %v1543
  %v1545 = vsel %vm1542, %v1544, %v1540
  %v1546 = vmul.f32 1.0, %v1545
  %v1547 = vxor.u32 %v1525, 2147483648
  %v1548 = vmul.f32 %v1547, 1.442695
  %v1549 = vpow.pop %v1548
  %v1550 = vadd.f32 %v1549, 1.0
  %v1551 = vrcp.pop %v1550
  %v1552 = vmul.f32 %v1550, %v1551
  %v1553 = vsub.f32 1.0, %v1552
  %v1554 = vmul.f32 %v1551, %v1553
  %v1555 = vadd.f32 %v1551, %v1554
  %vm1556 = vweird.f32 %v1550
  %vm1557 = vweird.f32 %v1551
  %vm1558 = vmor %vm1556, %vm1557
  %v1559 = vsel %vm1558, %v1551, %v1555
  %v1560 = vand.u32 2147483647, %v1550
  %vm1561 = vcmp.eq.f32.partialorder %v1560, 8.507059e+37
  %v1562 = vand.u32 %v1550, 2147483648
  %v1563 = vor.u32 1.1754944e-38, %v1562
  %v1564 = vsel %vm1561, %v1563, %v1559
  %v1565 = vmul.f32 1.0, %v1564
  %v1566 = vtanh.pop %v1526
  %v1567 = vxor.u32 %v1527, 2147483648
  %v1568 = vmul.f32 %v1567, 1.442695
  %v1569 = vpow.pop %v1568
  %v1570 = vadd.f32 %v1569, 1.0
  %v1571 = vrcp.pop %v1570
  %v1572 = vmul.f32 %v1570, %v1571
  %v1573 = vsub.f32 1.0, %v1572
  %v1574 = vmul.f32 %v1571, %v1573
  %v1575 = vadd.f32 %v1571, %v1574
  %vm1576 = vweird.f32 %v1570
  %vm1577 = vweird.f32 %v1571
  %vm1578 = vmor %vm1576, %vm1577
  %v1579 = vsel %vm1578, %v1571, %v1575
  %v1580 = vand.u32 2147483647, %v1570
  %vm1581 = vcmp.eq.f32.partialorder %v1580, 8.507059e+37
  %v1582 = vand.u32 %v1570, 2147483648
  %v1583 = vor.u32 1.1754944e-38, %v1582
  %v1584 = vsel %vm1581, %v1583, %v1579
  %v1585 = vmul.f32 1.0, %v1584
  %v1586 = vmul.f32 %v1565, %v1362
  %v1587 = vmul.f32 %v1546, %v1566
  %v1588 = vadd.f32 %v1586, %v1587
  %v1589 = vtanh.pop %v1588
  %v1590 = vmul.f32 %v1585, %v1589
  %s1591 = scalar_lea.vmem %s0, 48
  %v1592 = vld [vmem:[%s1591] sm:$0xff]
  %1594 = vset.pattern.permute.xlu0 0
  %1595 = vperm.xlu0 %1594, %v1592
  %v1596 = vpop.permute.xlu0 %1595
  %v1598 = vmul.f32 %v1590, %v1596
  %s1599 = scalar_lea.vmem %s3, 48
  %1600 = vst [vmem:[%s1599] sm:$0xff] %v1598
  %s1601 = scalar_lea.vmem %s1, 224
  %v1602 = vld [vmem:[%s1601] sm:$0xff]
  %v1603 = vld [vmem:[%s1601 + $0x8] sm:$0xff]
  %v1604 = vld [vmem:[%s1601 + $0x10] sm:$0xff]
  %v1605 = vld [vmem:[%s1601 + $0x18] sm:$0xff]
  %v1606 = vld [vmem:[%s2] sm:$0xff]
  %v1607 = vld [vmem:[%s2 + $0x8] sm:$0xff]
  %v1608 = vld [vmem:[%s2 + $0x10] sm:$0xff]
  %v1609 = vld [vmem:[%s2 + $0x18] sm:$0xff]
  %v1610 = vld [vmem:[%s2 + $0x20] sm:$0xff]
  %v1611 = vld [vmem:[%s2 + $0x28] sm:$0xff]
  %v1612 = vld [vmem:[%s2 + $0x30] sm:$0xff]
  %v1613 = vld [vmem:[%s2 + $0x38] sm:$0xff]
  %v1614 = vld [vmem:[%s2 + $0x40] sm:$0xff]
  %v1615 = vld [vmem:[%s2 + $0x48] sm:$0xff]
  %v1616 = vld [vmem:[%s2 + $0x50] sm:$0xff]
  %v1617 = vld [vmem:[%s2 + $0x58] sm:$0xff]
  %v1618 = vld [vmem:[%s2 + $0x60] sm:$0xff]
  %v1619 = vld [vmem:[%s2 + $0x68] sm:$0xff]
  %v1620 = vld [vmem:[%s2 + $0x70] sm:$0xff]
  %v1621 = vld [vmem:[%s2 + $0x78] sm:$0xff]
  %v1622 = vld [vmem:[%s2 + $0x80] sm:$0xff]
  %v1623 = vld [vmem:[%s2 + $0x88] sm:$0xff]
  %v1624 = vld [vmem:[%s2 + $0x90] sm:$0xff]
  %v1625 = vld [vmem:[%s2 + $0x98] sm:$0xff]
  %v1626 = vld [vmem:[%s2 + $0xa0] sm:$0xff]
  %v1627 = vld [vmem:[%s2 + $0xa8] sm:$0xff]
  %v1628 = vld [vmem:[%s2 + $0xb0] sm:$0xff]
  %v1629 = vld [vmem:[%s2 + $0xb8] sm:$0xff]
  %v1630 = vld [vmem:[%s2 + $0xc0] sm:$0xff]
  %v1631 = vld [vmem:[%s2 + $0xc8] sm:$0xff]
  %v1632 = vld [vmem:[%s2 + $0xd0] sm:$0xff]
  %v1633 = vld [vmem:[%s2 + $0xd8] sm:$0xff]
  %v1634 = vld [vmem:[%s2 + $0xe0] sm:$0xff]
  %v1635 = vld [vmem:[%s2 + $0xe8] sm:$0xff]
  %v1636 = vld [vmem:[%s2 + $0xf0] sm:$0xff]
  %v1637 = vld [vmem:[%s2 + $0xf8] sm:$0xff]
  %v1638 = vld [vmem:[%s2 + $0x100] sm:$0xff]
  %v1639 = vld [vmem:[%s2 + $0x108] sm:$0xff]
  %v1640 = vld [vmem:[%s2 + $0x110] sm:$0xff]
  %v1641 = vld [vmem:[%s2 + $0x118] sm:$0xff]
  %v1642 = vld [vmem:[%s2 + $0x120] sm:$0xff]
  %v1643 = vld [vmem:[%s2 + $0x128] sm:$0xff]
  %v1644 = vld [vmem:[%s2 + $0x130] sm:$0xff]
  %v1645 = vld [vmem:[%s2 + $0x138] sm:$0xff]
  %v1646 = vld [vmem:[%s2 + $0x140] sm:$0xff]
  %v1647 = vld [vmem:[%s2 + $0x148] sm:$0xff]
  %v1648 = vld [vmem:[%s2 + $0x150] sm:$0xff]
  %v1649 = vld [vmem:[%s2 + $0x158] sm:$0xff]
  %v1650 = vld [vmem:[%s2 + $0x160] sm:$0xff]
  %v1651 = vld [vmem:[%s2 + $0x168] sm:$0xff]
  %v1652 = vld [vmem:[%s2 + $0x170] sm:$0xff]
  %v1653 = vld [vmem:[%s2 + $0x178] sm:$0xff]
  %v1654 = vld [vmem:[%s2 + $0x180] sm:$0xff]
  %v1655 = vld [vmem:[%s2 + $0x188] sm:$0xff]
  %v1656 = vld [vmem:[%s2 + $0x190] sm:$0xff]
  %v1657 = vld [vmem:[%s2 + $0x198] sm:$0xff]
  %v1658 = vld [vmem:[%s2 + $0x1a0] sm:$0xff]
  %v1659 = vld [vmem:[%s2 + $0x1a8] sm:$0xff]
  %v1660 = vld [vmem:[%s2 + $0x1b0] sm:$0xff]
  %v1661 = vld [vmem:[%s2 + $0x1b8] sm:$0xff]
  %v1662 = vld [vmem:[%s2 + $0x1c0] sm:$0xff]
  %v1663 = vld [vmem:[%s2 + $0x1c8] sm:$0xff]
  %v1664 = vld [vmem:[%s2 + $0x1d0] sm:$0xff]
  %v1665 = vld [vmem:[%s2 + $0x1d8] sm:$0xff]
  %v1666 = vld [vmem:[%s2 + $0x1e0] sm:$0xff]
  %v1667 = vld [vmem:[%s2 + $0x1e8] sm:$0xff]
  %v1668 = vld [vmem:[%s2 + $0x1f0] sm:$0xff]
  %v1669 = vld [vmem:[%s2 + $0x1f8] sm:$0xff]
  %1670 = vmatpush.msra.mxu0 %v1666
  %1671 = vmatpush.msra.mxu0 %v1662
  %1672 = vmatpush.msra.mxu0 %v1658
  %1673 = vmatpush.msra.mxu0 %v1654
  %1674 = vmatpush.msra.mxu0 %v1650
  %1675 = vmatpush.msra.mxu0 %v1646
  %1676 = vmatpush.msra.mxu0 %v1642
  %1677 = vmatpush.msra.mxu0 %v1638
  %1678 = vmatpush.msra.mxu0 %v1634
  %1679 = vmatpush.msra.mxu0 %v1630
  %1680 = vmatpush.msra.mxu0 %v1626
  %1681 = vmatpush.msra.mxu0 %v1622
  %1682 = vmatpush.msra.mxu0 %v1618
  %1683 = vmatpush.msra.mxu0 %v1614
  %1684 = vmatpush.msra.mxu0 %v1610
  %1685 = vmatpush.msra.mxu0 %v1606
  %1686 = vmatmul.f32.gmra.mxu0 %v1590
  %v1687 = vpop.f32.mrf.mxu0
  %v1688 = vadd.f32 0.0, %v1687
  %1689 = vdwg.mxu0
  %1690 = vmatpush.msra.mxu0 %v1667
  %1691 = vmatpush.msra.mxu0 %v1663
  %1692 = vmatpush.msra.mxu0 %v1659
  %1693 = vmatpush.msra.mxu0 %v1655
  %1694 = vmatpush.msra.mxu0 %v1651
  %1695 = vmatpush.msra.mxu0 %v1647
  %1696 = vmatpush.msra.mxu0 %v1643
  %1697 = vmatpush.msra.mxu0 %v1639
  %1698 = vmatpush.msra.mxu0 %v1635
  %1699 = vmatpush.msra.mxu0 %v1631
  %1700 = vmatpush.msra.mxu0 %v1627
  %1701 = vmatpush.msra.mxu0 %v1623
  %1702 = vmatpush.msra.mxu0 %v1619
  %1703 = vmatpush.msra.mxu0 %v1615
  %1704 = vmatpush.msra.mxu0 %v1611
  %1705 = vmatpush.msra.mxu0 %v1607
  %1706 = vmatmul.f32.gmra.mxu0 %v1590
  %v1707 = vpop.f32.mrf.mxu0
  %v1708 = vadd.f32 0.0, %v1707
  %1709 = vdwg.mxu0
  %1710 = vmatpush.msra.mxu0 %v1668
  %1711 = vmatpush.msra.mxu0 %v1664
  %1712 = vmatpush.msra.mxu0 %v1660
  %1713 = vmatpush.msra.mxu0 %v1656
  %1714 = vmatpush.msra.mxu0 %v1652
  %1715 = vmatpush.msra.mxu0 %v1648
  %1716 = vmatpush.msra.mxu0 %v1644
  %1717 = vmatpush.msra.mxu0 %v1640
  %1718 = vmatpush.msra.mxu0 %v1636
  %1719 = vmatpush.msra.mxu0 %v1632
  %1720 = vmatpush.msra.mxu0 %v1628
  %1721 = vmatpush.msra.mxu0 %v1624
  %1722 = vmatpush.msra.mxu0 %v1620
  %1723 = vmatpush.msra.mxu0 %v1616
  %1724 = vmatpush.msra.mxu0 %v1612
  %1725 = vmatpush.msra.mxu0 %v1608
  %1726 = vmatmul.f32.gmra.mxu0 %v1590
  %v1727 = vpop.f32.mrf.mxu0
  %v1728 = vadd.f32 0.0, %v1727
  %1729 = vdwg.mxu0
  %1730 = vmatpush.msra.mxu0 %v1669
  %1731 = vmatpush.msra.mxu0 %v1665
  %1732 = vmatpush.msra.mxu0 %v1661
  %1733 = vmatpush.msra.mxu0 %v1657
  %1734 = vmatpush.msra.mxu0 %v1653
  %1735 = vmatpush.msra.mxu0 %v1649
  %1736 = vmatpush.msra.mxu0 %v1645
  %1737 = vmatpush.msra.mxu0 %v1641
  %1738 = vmatpush.msra.mxu0 %v1637
  %1739 = vmatpush.msra.mxu0 %v1633
  %1740 = vmatpush.msra.mxu0 %v1629
  %1741 = vmatpush.msra.mxu0 %v1625
  %1742 = vmatpush.msra.mxu0 %v1621
  %1743 = vmatpush.msra.mxu0 %v1617
  %1744 = vmatpush.msra.mxu0 %v1613
  %1745 = vmatpush.msra.mxu0 %v1609
  %1746 = vmatmul.f32.gmra.mxu0 %v1590
  %v1747 = vpop.f32.mrf.mxu0
  %v1748 = vadd.f32 0.0, %v1747
  %1749 = vdwg.mxu0
  %v1750 = vadd.f32 %v1602, %v1688
  %v1751 = vadd.f32 %v1603, %v1708
  %v1752 = vadd.f32 %v1604, %v1728
  %v1753 = vadd.f32 %v1605, %v1748
  %v1754 = vxor.u32 %v1750, 2147483648
  %v1755 = vmul.f32 %v1754, 1.442695
  %v1756 = vpow.pop %v1755
  %v1757 = vadd.f32 %v1756, 1.0
  %v1758 = vrcp.pop %v1757
  %v1759 = vmul.f32 %v1757, %v1758
  %v1760 = vsub.f32 1.0, %v1759
  %v1761 = vmul.f32 %v1758, %v1760
  %v1762 = vadd.f32 %v1758, %v1761
  %vm1763 = vweird.f32 %v1757
  %vm1764 = vweird.f32 %v1758
  %vm1765 = vmor %vm1763, %vm1764
  %v1766 = vsel %vm1765, %v1758, %v1762
  %v1767 = vand.u32 2147483647, %v1757
  %vm1768 = vcmp.eq.f32.partialorder %v1767, 8.507059e+37
  %v1769 = vand.u32 %v1757, 2147483648
  %v1770 = vor.u32 1.1754944e-38, %v1769
  %v1771 = vsel %vm1768, %v1770, %v1766
  %v1772 = vmul.f32 1.0, %v1771
  %v1773 = vxor.u32 %v1751, 2147483648
  %v1774 = vmul.f32 %v1773, 1.442695
  %v1775 = vpow.pop %v1774
  %v1776 = vadd.f32 %v1775, 1.0
  %v1777 = vrcp.pop %v1776
  %v1778 = vmul.f32 %v1776, %v1777
  %v1779 = vsub.f32 1.0, %v1778
  %v1780 = vmul.f32 %v1777, %v1779
  %v1781 = vadd.f32 %v1777, %v1780
  %vm1782 = vweird.f32 %v1776
  %vm1783 = vweird.f32 %v1777
  %vm1784 = vmor %vm1782, %vm1783
  %v1785 = vsel %vm1784, %v1777, %v1781
  %v1786 = vand.u32 2147483647, %v1776
  %vm1787 = vcmp.eq.f32.partialorder %v1786, 8.507059e+37
  %v1788 = vand.u32 %v1776, 2147483648
  %v1789 = vor.u32 1.1754944e-38, %v1788
  %v1790 = vsel %vm1787, %v1789, %v1785
  %v1791 = vmul.f32 1.0, %v1790
  %v1792 = vtanh.pop %v1752
  %v1793 = vxor.u32 %v1753, 2147483648
  %v1794 = vmul.f32 %v1793, 1.442695
  %v1795 = vpow.pop %v1794
  %v1796 = vadd.f32 %v1795, 1.0
  %v1797 = vrcp.pop %v1796
  %v1798 = vmul.f32 %v1796, %v1797
  %v1799 = vsub.f32 1.0, %v1798
  %v1800 = vmul.f32 %v1797, %v1799
  %v1801 = vadd.f32 %v1797, %v1800
  %vm1802 = vweird.f32 %v1796
  %vm1803 = vweird.f32 %v1797
  %vm1804 = vmor %vm1802, %vm1803
  %v1805 = vsel %vm1804, %v1797, %v1801
  %v1806 = vand.u32 2147483647, %v1796
  %vm1807 = vcmp.eq.f32.partialorder %v1806, 8.507059e+37
  %v1808 = vand.u32 %v1796, 2147483648
  %v1809 = vor.u32 1.1754944e-38, %v1808
  %v1810 = vsel %vm1807, %v1809, %v1805
  %v1811 = vmul.f32 1.0, %v1810
  %v1812 = vmul.f32 %v1791, %v1588
  %v1813 = vmul.f32 %v1772, %v1792
  %v1814 = vadd.f32 %v1812, %v1813
  %v1815 = vtanh.pop %v1814
  %v1816 = vmul.f32 %v1811, %v1815
  %s1817 = scalar_lea.vmem %s0, 56
  %v1818 = vld [vmem:[%s1817] sm:$0xff]
  %1820 = vset.pattern.permute.xlu0 0
  %1821 = vperm.xlu0 %1820, %v1818
  %v1822 = vpop.permute.xlu0 %1821
  %v1824 = vmul.f32 %v1816, %v1822
  %s1825 = scalar_lea.vmem %s3, 56
  %1826 = vst [vmem:[%s1825] sm:$0xff] %v1824
  %1827 = vst [vmem:[#allocation2] sm:$0xff] %v1816
  %1828 = vst [vmem:[#allocation3] sm:$0xff] %v1814
  // Predicated region
  $region18: #{seq2seq_encoder_forward.1} parent=0 // pred_check
    _
  $region19: #{seq2seq_encoder_forward.1} parent=0 // pred_check_branch
    %1830 = sbr.rel (0) target = $region21
  $region20: #{seq2seq_encoder_forward.1} parent=0 // pred_region
    _
  $region21: #{seq2seq_encoder_forward.1} parent=0 // pred_fallthru
    _
  // Predicated region
  $region22: #{seq2seq_encoder_forward.1} parent=0 // pred_check
    _
  $region23: #{seq2seq_encoder_forward.1} parent=0 // pred_check_branch
    %1832 = sbr.rel (0) target = $region25
  $region24: #{seq2seq_encoder_forward.1} parent=0 // pred_region
    _
  $region25: #{seq2seq_encoder_forward.1} parent=0 // pred_fallthru
    _

</llo_original>
